<compile_context>
chip_gen: v7x
topology: tpu7x:2x2x1
jax: 0.10.0
libtpu: 0.0.40
codegen_flags: <defaults>
</compile_context>

<pallas_src>
import jax
import jax.numpy as jnp
import numpy as np
from jax.experimental import pallas as pl
from jax.experimental.pallas import tpu as pltpu

MA_KERNEL = 2 * 125 + 1   # 251
MV_KERNEL = 4 * 125 + 1   # 501
MA_HALF = (MA_KERNEL - 1) // 2
MV_HALF = (MV_KERNEL - 1) // 2
EPS = 1e-5


def _preproc_kernel(x_ref, o_ref):
    # x_ref / o_ref: (row_tile, T) block of the flattened (B*C, T) signal.
    x = x_ref[...].astype(jnp.float32)
    t = x.shape[-1]

    # (1) z-score over time (torch.std default is unbiased => ddof=1).
    mean = jnp.mean(x, axis=-1, keepdims=True)
    d = x - mean
    var = jnp.sum(d * d, axis=-1, keepdims=True) / (t - 1)
    y = d / (jnp.sqrt(var) + EPS)

    # Banded averaging matrices generated on the fly: exact 0/1 masks in bf16,
    # normalization (1/k) applied after the f32-accumulated matmul.
    src = jax.lax.broadcasted_iota(jnp.int32, (t, t), 0)
    dst = jax.lax.broadcasted_iota(jnp.int32, (t, t), 1)
    dist = jnp.abs(src - dst)
    band_ma = jnp.where(dist <= MA_HALF, 1.0, 0.0).astype(jnp.bfloat16)
    band_mv = jnp.where(dist <= MV_HALF, 1.0, 0.0).astype(jnp.bfloat16)

    # (2) subtract moving average: avg_pool1d(y, 251) with zero padding.
    ma = jnp.dot(y.astype(jnp.bfloat16), band_ma,
                 preferred_element_type=jnp.float32) * (1.0 / MA_KERNEL)
    y = y - ma

    # (3) divide by moving RMS: sqrt(avg_pool1d(y^2, 501)).
    mv = jnp.dot((y * y).astype(jnp.bfloat16), band_mv,
                 preferred_element_type=jnp.float32) * (1.0 / MV_KERNEL)
    o_ref[...] = (y / (jnp.sqrt(mv) + EPS)).astype(o_ref.dtype)


def preprocessor_forward(x, *, row_tile=None):
    """x: (B, C, T) float32 -> (B, C, T) float32, matching the PyTorch module."""
    B, C, T = x.shape
    rows = B * C
    x2d = x.reshape(rows, T)

    if row_tile is None:
        # Big tiles feed the MXU; halve until the grid has >= 2 steps so v7x
        # megacore can shard the "parallel" row axis across both TensorCores.
        row_tile = 256
        while row_tile > 8 and (rows + row_tile - 1) // row_tile < 2:
            row_tile //= 2
    row_tile = max(8, row_tile)

    num_tiles = max(2, (rows + row_tile - 1) // row_tile)
    total_rows = num_tiles * row_tile
    pad_rows = total_rows - rows
    if pad_rows:
        # Zero pad rows degrade to all-zero outputs (no NaN/Inf); sliced off below.
        x2d = jnp.pad(x2d, ((0, pad_rows), (0, 0)))

    # Explicit scoped-VMEM budget: in/out tiles (double-buffered) + bf16 band
    # masks + iota/f32 temporaries, clamped to a safe physical ceiling.
    est = (2 * 2 * row_tile * T * 4        # in + out tiles, 2 pipeline buffers
           + 2 * T * T * 2                 # two bf16 band masks
           + 2 * T * T * 4                 # iota / mask temporaries
           + 8 * row_tile * T * 4)         # f32 elementwise temporaries
    vmem_limit = int(min(max(est, 32 * 1024 * 1024), 64 * 1024 * 1024))

    out = pl.pallas_call(
        _preproc_kernel,
        out_shape=jax.ShapeDtypeStruct((total_rows, T), jnp.float32),
        grid_spec=pltpu.PrefetchScalarGridSpec(
            num_scalar_prefetch=0,
            grid=(num_tiles,),
            in_specs=[pl.BlockSpec((row_tile, T), lambda i: (i, 0))],
            out_specs=pl.BlockSpec((row_tile, T), lambda i: (i, 0)),
        ),
        compiler_params=pltpu.CompilerParams(
            dimension_semantics=("parallel",),
            vmem_limit_bytes=vmem_limit),
    )(x2d)

    return out[:rows].reshape(B, C, T)


# ----------------------- pure-JAX reference (for checking) -----------------------
def _avg_pool1d_ref(x, k):
    pad = (k - 1) // 2
    xp = jnp.pad(x, ((0, 0), (0, 0), (pad, pad)))
    cs = jnp.cumsum(xp, axis=-1)
    cs = jnp.pad(cs, ((0, 0), (0, 0), (1, 0)))
    return (cs[..., k:] - cs[..., :-k]) / k


def _reference(x):
    T = x.shape[-1]
    mean = jnp.mean(x, axis=2, keepdims=True)
    d = x - mean
    std = jnp.sqrt(jnp.sum(d * d, axis=2, keepdims=True) / (T - 1))
    y = d / (std + EPS)
    y = y - _avg_pool1d_ref(y, MA_KERNEL)
    y = y / (jnp.sqrt(_avg_pool1d_ref(y * y, MV_KERNEL)) + EPS)
    return y


if __name__ == "__main__":
    key = jax.random.PRNGKey(0)
    B, C, T = 2, 4, 512  # small 1D-signal shapes consistent with the module
    x = jax.random.normal(key, (B, C, T), dtype=jnp.float32) * 3.0 + 1.5

    out = jax.block_until_ready(preprocessor_forward(x))
    ref = jax.block_until_ready(_reference(x))

    # bf16 MXU operands (exact 0/1 masks, f32 accumulation) => ~1e-3-scale error.
    np.testing.assert_allclose(np.asarray(out), np.asarray(ref),
                               rtol=5e-3, atol=5e-3)
    print("KERNEL_OK")
</pallas_src>

<mosaic_0001>
module attributes {stable_mosaic.version = 11 : i64} {
  func.func @_preproc_kernel(%arg0: i32, %arg1: memref<8x512xf32, #tpu.memory_space<vmem>>, %arg2: memref<8x512xf32, #tpu.memory_space<vmem>>) attributes {dimension_semantics = [#tpu.dimension_semantics<parallel>], iteration_bounds = array<i64: 2>, scalar_prefetch = 0 : i64, scratch_operands = 0 : i64, tpu.core_type = #tpu.core_type<tc>, window_params = [{transform_indices = @transform_0, window_bounds = array<i64: 8, 512>}, {transform_indices = @transform_1, window_bounds = array<i64: 8, 512>}]} {
    %c0 = arith.constant 0 : index
    %c0_0 = arith.constant 0 : index
    %0 = vector.load %arg1[%c0, %c0_0] : memref<8x512xf32, #tpu.memory_space<vmem>>, vector<8x512xf32>
    %cst = arith.constant dense<0.000000e+00> : vector<8xf32>
    %1 = vector.multi_reduction <add>, %0, %cst [1] : vector<8x512xf32> to vector<8xf32>
    %2 = vector.shape_cast %1 : vector<8xf32> to vector<8x1xf32>
    %cst_1 = arith.constant 5.120000e+02 : f32
    %3 = vector.broadcast %cst_1 : f32 to vector<8x1xf32>
    %4 = arith.divf %2, %3 : vector<8x1xf32>
    %5 = vector.broadcast %4 : vector<8x1xf32> to vector<8x512xf32>
    %6 = arith.subf %0, %5 : vector<8x512xf32>
    %7 = arith.mulf %6, %6 : vector<8x512xf32>
    %cst_2 = arith.constant dense<0.000000e+00> : vector<8xf32>
    %8 = vector.multi_reduction <add>, %7, %cst_2 [1] : vector<8x512xf32> to vector<8xf32>
    %9 = vector.shape_cast %8 : vector<8xf32> to vector<8x1xf32>
    %cst_3 = arith.constant 5.110000e+02 : f32
    %10 = vector.broadcast %cst_3 : f32 to vector<8x1xf32>
    %11 = arith.divf %9, %10 : vector<8x1xf32>
    %12 = math.sqrt %11 : vector<8x1xf32>
    %cst_4 = arith.constant 9.99999974E-6 : f32
    %13 = vector.broadcast %cst_4 : f32 to vector<8x1xf32>
    %14 = arith.addf %12, %13 : vector<8x1xf32>
    %15 = vector.broadcast %14 : vector<8x1xf32> to vector<8x512xf32>
    %16 = arith.divf %6, %15 : vector<8x512xf32>
    %17 = tpu.iota {dimensions = array<i32: 0>} : vector<512x512xi32>
    %18 = tpu.iota {dimensions = array<i32: 1>} : vector<512x512xi32>
    %19 = arith.subi %17, %18 : vector<512x512xi32>
    %20 = math.absi %19 : vector<512x512xi32>
    %c125_i32 = arith.constant 125 : i32
    %21 = vector.broadcast %c125_i32 : i32 to vector<512x512xi32>
    %22 = arith.cmpi sle, %20, %21 : vector<512x512xi32>
    %cst_5 = arith.constant 1.000000e+00 : f32
    %cst_6 = arith.constant 0.000000e+00 : f32
    %23 = vector.broadcast %cst_5 : f32 to vector<512x512xf32>
    %24 = vector.broadcast %cst_6 : f32 to vector<512x512xf32>
    %25 = arith.select %22, %23, %24 : vector<512x512xi1>, vector<512x512xf32>
    %26 = arith.truncf %25 : vector<512x512xf32> to vector<512x512xbf16>
    %c250_i32 = arith.constant 250 : i32
    %27 = vector.broadcast %c250_i32 : i32 to vector<512x512xi32>
    %28 = arith.cmpi sle, %20, %27 : vector<512x512xi32>
    %cst_7 = arith.constant 1.000000e+00 : f32
    %cst_8 = arith.constant 0.000000e+00 : f32
    %29 = vector.broadcast %cst_7 : f32 to vector<512x512xf32>
    %30 = vector.broadcast %cst_8 : f32 to vector<512x512xf32>
    %31 = arith.select %28, %29, %30 : vector<512x512xi1>, vector<512x512xf32>
    %32 = arith.truncf %31 : vector<512x512xf32> to vector<512x512xbf16>
    %33 = arith.truncf %16 : vector<8x512xf32> to vector<8x512xbf16>
    %cst_9 = arith.constant dense<0.000000e+00> : vector<8x512xf32>
    %34 = tpu.matmul %33, %26, %cst_9 {dimension_numbers = #tpu.dot_dimension_numbers<[1], [0], [0], [1], [0, 0, 1, 1], [], []>} : vector<8x512xbf16>, vector<512x512xbf16>, vector<8x512xf32> -> vector<8x512xf32>
    %cst_10 = arith.constant 0.00398406386 : f32
    %35 = vector.broadcast %cst_10 : f32 to vector<8x512xf32>
    %36 = arith.mulf %34, %35 : vector<8x512xf32>
    %37 = arith.subf %16, %36 : vector<8x512xf32>
    %38 = arith.mulf %37, %37 : vector<8x512xf32>
    %39 = arith.truncf %38 : vector<8x512xf32> to vector<8x512xbf16>
    %cst_11 = arith.constant dense<0.000000e+00> : vector<8x512xf32>
    %40 = tpu.matmul %39, %32, %cst_11 {dimension_numbers = #tpu.dot_dimension_numbers<[1], [0], [0], [1], [0, 0, 1, 1], [], []>} : vector<8x512xbf16>, vector<512x512xbf16>, vector<8x512xf32> -> vector<8x512xf32>
    %cst_12 = arith.constant 0.00199600798 : f32
    %41 = vector.broadcast %cst_12 : f32 to vector<8x512xf32>
    %42 = arith.mulf %40, %41 : vector<8x512xf32>
    %43 = math.sqrt %42 : vector<8x512xf32>
    %cst_13 = arith.constant 9.99999974E-6 : f32
    %44 = vector.broadcast %cst_13 : f32 to vector<8x512xf32>
    %45 = arith.addf %43, %44 : vector<8x512xf32>
    %46 = arith.divf %37, %45 : vector<8x512xf32>
    %c0_14 = arith.constant 0 : index
    %c0_15 = arith.constant 0 : index
    %47 = vector.load %arg2[%c0_14, %c0_15] : memref<8x512xf32, #tpu.memory_space<vmem>>, vector<8x512xf32>
    tpu.vector_store %arg2[%c0_14, %c0_15], %46 {strides = array<i32>} : memref<8x512xf32, #tpu.memory_space<vmem>>, vector<8x512xf32>,
    return
  }
  func.func @transform_0(%arg0: i32) -> (i32, i32) {
    %c0_i32 = arith.constant 0 : i32
    %c0_i32_0 = arith.constant 0 : i32
    return %arg0, %c0_i32 : i32, i32
  }
  func.func @transform_1(%arg0: i32) -> (i32, i32) {
    %c0_i32 = arith.constant 0 : i32
    %c0_i32_0 = arith.constant 0 : i32
    return %arg0, %c0_i32 : i32, i32
  }
}

</mosaic_0001>

<llo_original>
// kernel: tpu_custom_call.1
$region0: #{tpu_custom_call.1}
  #allocation0 [shape = 'u32[]', space=smem, size = 0x4, offset = 0x4, fixed_abs, tag = 'smem constant byte address 0x4 - core index']
  #allocation1 [shape = 'u32[144,128]{1,0:T(1,128)}', space=vmem, size = 0x12000, scoped, tag = 'internal scratch']
  %s0 = inlined_call_operand.hbm [shape: f32[16,512], index: 0, kind: input, shape index: {}]
  %s1 = inlined_call_operand.hbm [shape: f32[16,512], index: 1, kind: output, shape index: {}]
  %s2 = sld [smem:[#allocation0]]
  $region41: #{tpu_custom_call.1} parent=0
    _
  %s4 = ssub.s32 1, %s2
  %s5 = scalar_select 0, %s4, %s2
  $region1: #{tpu_custom_call.1} parent=0
    #allocation2 [shape = 'u8[32768]{0}', space=vmem, size = 0x8000, scoped, tag = 'input window, operand 0']
    #allocation3 [shape = 's32[2]{0}', space=sflag, size = 0x8, scoped, tag = 'scoped memory for tpu_custom_call.1']
    #allocation4 [shape = 's32[2]{0}', space=sflag, size = 0x8, scoped, tag = 'scoped memory for tpu_custom_call.1']
    #allocation5 [shape = 'u8[32768]{0}', space=vmem, size = 0x8000, scoped, tag = 'output window, operand 0']
    %6 = vsyncpa [#allocation3], 0
    %s7 = scalar_lea.sflag [#allocation3], 1
    %8 = vsyncpa %s7, 0
    %9 = vsyncpa [#allocation4], 0
    %s10 = scalar_lea.sflag [#allocation4], 1
    %11 = vsyncpa %s10, 0
    loop: start=0, step=1, limit=4
    $region2: #{tpu_custom_call.1} parent=1 // loop_pre_header
      _
    $region3: #{tpu_custom_call.1} parent=1 // loop_header
      %s13 = sphi 0, %s17
      %p14 = scmp.ge.s32.totalorder %s13, 4
      %s23 = sphi 0, %s25
      %s26 = sphi 0, %s23
      %s27 = sphi 0, %s26
      %s43 = sphi 0, %s27
      %s49 = sphi 0, %s51
      %s52 = sphi 0, %s49
      %s53 = sphi 0, %s52
      %s69 = sphi 0, %s53
    $region4: #{tpu_custom_call.1} parent=1 // loop_header_branch
      %16 = sbr.rel (%p14) target = $region8
    $region5: #{tpu_custom_call.1} parent=1 // loop_body
      %s18 = ssub.s32 %s13, 1
      %s19 = ssub.s32 %s13, 2
      %s20 = sadd.s32 %s13, 1
      %s21 = ssub.s32 %s13, %s20
      %p22 = scmp.eq.s32.totalorder %s21, 0
      %s24 = sadd.s32 %s23, 1
      %s25 = scalar_select %p22, %s23, %s24
      %p28 = pneg %p22
      %p29 = scmp.eq.s32.totalorder %s13, 1
      %p30 = por %p28, %p29
      %p31 = scmp.ne.s32.totalorder %s23, %s26
      %p32 = scmp.eq.s32.totalorder %s13, 0
      %p33 = por %p31, %p32
      %p34 = scmp.ne.s32.totalorder %s23, %s26
      %p35 = scmp.eq.s32.totalorder %s18, 1
      %p36 = por %p34, %p35
      %p37 = scmp.ne.s32.totalorder %s26, %s27
      %p38 = scmp.eq.s32.totalorder %s18, 0
      %p39 = por %p37, %p38
      %p40 = scmp.ne.s32.totalorder %s26, %s27
      %p41 = scmp.eq.s32.totalorder %s19, 1
      %p42 = por %p40, %p41
      %p44 = scmp.ne.s32.totalorder %s27, %s43
      %p45 = scmp.eq.s32.totalorder %s19, 0
      %p46 = por %p44, %p45
      %s47 = ssub.s32 %s13, %s20
      %p48 = scmp.eq.s32.totalorder %s47, 0
      %s50 = sadd.s32 %s49, 1
      %s51 = scalar_select %p48, %s49, %s50
      %p54 = pneg %p48
      %p55 = scmp.eq.s32.totalorder %s13, 1
      %p56 = por %p54, %p55
      %p57 = scmp.ne.s32.totalorder %s49, %s52
      %p58 = scmp.eq.s32.totalorder %s13, 0
      %p59 = por %p57, %p58
      %p60 = scmp.ne.s32.totalorder %s49, %s52
      %p61 = scmp.eq.s32.totalorder %s18, 1
      %p62 = por %p60, %p61
      %p63 = scmp.ne.s32.totalorder %s52, %s53
      %p64 = scmp.eq.s32.totalorder %s18, 0
      %p65 = por %p63, %p64
      %p66 = scmp.ne.s32.totalorder %s52, %s53
      %p67 = scmp.eq.s32.totalorder %s19, 1
      %p68 = por %p66, %p67
      %p70 = scmp.ne.s32.totalorder %s53, %s69
      %p71 = scmp.eq.s32.totalorder %s19, 0
      %p72 = por %p70, %p71
      %p73 = scmp.le.s32.totalorder 1, %s13
      %p74 = scmp.lt.s32.totalorder %s13, 3
      %p75 = pnand %p73, %p74
      %p76 = pneg %p75
      // Predicated region
      $region9: #{tpu_custom_call.1} parent=5 // pred_check
        _
      $region10: #{tpu_custom_call.1} parent=5 // pred_check_branch
        %78 = sbr.rel (%p75) target = $region12
      $region11: #{tpu_custom_call.1} parent=5 // pred_region
        %s79 = ssub.s32 %s13, 1
      $region12: #{tpu_custom_call.1} parent=5 // pred_fallthru
        _
      %p80 = scmp.lt.s32.totalorder %s13, 2
      // Predicated region
      $region13: #{tpu_custom_call.1} parent=5 // pred_check
        %p81 = pneg %p80
      $region14: #{tpu_custom_call.1} parent=5 // pred_check_branch
        %83 = sbr.rel (%p81) target = $region16
      $region15: #{tpu_custom_call.1} parent=5 // pred_region
        // Predicated region
        $region17: #{tpu_custom_call.1} parent=15 // pred_check
          %p84 = pneg %p33
        $region18: #{tpu_custom_call.1} parent=15 // pred_check_branch
          %86 = sbr.rel (%p84) target = $region20
        $region19: #{tpu_custom_call.1} parent=15 // pred_region
          %s87 = sand.u32 %s23, 1
          %s88 = scalar_lea.sflag [#allocation3], %s87
          %s89 = sand.u32 %s23, 1
          %s90 = smul.addr %s89, 32
          %s91 = scalar_lea.vmem [#allocation2], %s90
          %s93 = ssub.s32 512, 512
          %94 = vsyncadd %s88, %s93
          %s95 = smul.addr %s13, 4
          %s96 = smul.addr %s95, 128
          %s97 = scalar_lea.hbm %s0, %s96
          %s99 = sshll.u32 %s91, 4
          %s100 = int_to_ptr.vmem [resolvable:$true] %s99
          %102 = dma.hbm_to_vmem [thread:$0]  %s97, 512, %s100, %s88
        $region20: #{tpu_custom_call.1} parent=15 // pred_fallthru
          _
      $region16: #{tpu_custom_call.1} parent=5 // pred_fallthru
        _
      %p103 = scmp.le.s32.totalorder 1, %s13
      %p104 = scmp.lt.s32.totalorder %s13, 3
      %p105 = pnand %p103, %p104
      %p106 = pneg %p105
      // Predicated region
      $region21: #{tpu_custom_call.1} parent=5 // pred_check
        _
      $region22: #{tpu_custom_call.1} parent=5 // pred_check_branch
        %108 = sbr.rel (%p105) target = $region24
      $region23: #{tpu_custom_call.1} parent=5 // pred_region
        %s109 = ssub.s32 %s13, 1
        %s110 = sand.u32 %s26, 1
        %s111 = scalar_lea.sflag [#allocation3], %s110
        %s112 = sand.u32 %s26, 1
        %s113 = smul.addr %s112, 32
        %s114 = scalar_lea.vmem [#allocation2], %s113
        // Predicated region
        $region25: #{tpu_custom_call.1} parent=23 // pred_check
          %p115 = pneg %p39
        $region26: #{tpu_custom_call.1} parent=23 // pred_check_branch
          %117 = sbr.rel (%p115) target = $region28
        $region27: #{tpu_custom_call.1} parent=23 // pred_region
          %118 = dma.done %s111, 512
        $region28: #{tpu_custom_call.1} parent=23 // pred_fallthru
          _
        %s119 = sand.u32 %s26, 1
        %s120 = scalar_lea.sflag [#allocation3], %s119
        %s121 = sand.u32 %s26, 1
        %s122 = smul.addr %s121, 32
        %s123 = scalar_lea.vmem [#allocation2], %s122
        %p124 = pneg %p39
        %p125 = pneg %p36
        %p126 = pneg %p65
        %p127 = pneg %p62
        %s128 = sand.u32 %s52, 1
        %s129 = scalar_lea.sflag [#allocation4], %s128
        %s130 = sand.u32 %s52, 1
        %s131 = smul.addr %s130, 32
        %s132 = scalar_lea.vmem [#allocation5], %s131
        %v133 = vld [vmem:[%s114] sm:$0xff]
        %v134 = vld [vmem:[%s114 + $0x8] sm:$0xff]
        %v135 = vld [vmem:[%s114 + $0x10] sm:$0xff]
        %v136 = vld [vmem:[%s114 + $0x18] sm:$0xff]
        %v137 = vadd.f32 %v133, %v134
        %v138 = vadd.f32 %v137, %v135
        %v139 = vadd.f32 %v138, %v136
        %140 = vadd.xlane.f32.xlu0 %v139
        %v141 = vpop.xlane.xlu0 %140
        %v142 = vrcp.pop 512.0
        %v143 = vmul.f32 %v141, %v142
        %v144 = vsub.f32 %v133, %v143
        %v145 = vsub.f32 %v134, %v143
        %v146 = vsub.f32 %v135, %v143
        %v147 = vsub.f32 %v136, %v143
        %v148 = vmul.f32 %v144, %v144
        %v149 = vmul.f32 %v145, %v145
        %v150 = vmul.f32 %v146, %v146
        %v151 = vmul.f32 %v147, %v147
        %v152 = vadd.f32 %v148, %v149
        %v153 = vadd.f32 %v152, %v150
        %v154 = vadd.f32 %v153, %v151
        %155 = vadd.xlane.f32.xlu0 %v154
        %v156 = vpop.xlane.xlu0 %155
        %v157 = vrcp.pop 511.0
        %v158 = vmul.f32 %v156, %v157
        %v159 = vrsqrt.pop %v158
        %v160 = vmul.f32 %v158, %v159
        %vm161 = vcmp.eq.f32.partialorder %v158, inf
        %v162 = vsel %vm161, %v158, %v160
        %vm163 = vcmp.eq.f32.partialorder %v158, 0.0
        %v164 = vand.u32 %v158, 2147483648
        %v165 = vsel %vm163, %v164, %v162
        %v166 = vadd.f32 %v165, 1e-05
        %v167 = vrcp.pop %v166
        %v168 = vmul.f32 %v144, %v167
        %v169 = vmul.f32 %v145, %v167
        %v170 = vmul.f32 %v146, %v167
        %v171 = vmul.f32 %v147, %v167
        %v172 = vlaneseq
        %v173 = vshrl.u32 %v172, 7
        %v174 = vadd.s32 %v173, 8
        %v175 = vadd.s32 %v173, 16
        %v176 = vadd.s32 %v173, 24
        %v177 = vadd.s32 %v173, 32
        %v178 = vadd.s32 %v173, 40
        %v179 = vadd.s32 %v173, 48
        %v180 = vadd.s32 %v173, 56
        %v181 = vadd.s32 %v173, 64
        %v182 = vadd.s32 %v173, 72
        %v183 = vadd.s32 %v173, 80
        %v184 = vadd.s32 %v173, 88
        %v185 = vadd.s32 %v173, 96
        %v186 = vadd.s32 %v173, 104
        %v187 = vadd.s32 %v173, 112
        %v188 = vadd.s32 %v173, 120
        %v189 = vadd.s32 %v173, 128
        %v190 = vadd.s32 %v173, 136
        %v191 = vadd.s32 %v173, 144
        %v192 = vadd.s32 %v173, 152
        %v193 = vadd.s32 %v173, 160
        %v194 = vadd.s32 %v173, 168
        %v195 = vadd.s32 %v173, 176
        %v196 = vadd.s32 %v173, 184
        %v197 = vadd.s32 %v173, 192
        %v198 = vadd.s32 %v173, 200
        %v199 = vadd.s32 %v173, 208
        %v200 = vadd.s32 %v173, 216
        %v201 = vadd.s32 %v173, 224
        %v202 = vadd.s32 %v173, 232
        %v203 = vadd.s32 %v173, 240
        %v204 = vadd.s32 %v173, 248
        %v205 = vadd.s32 %v173, 256
        %v206 = vadd.s32 %v173, 264
        %v207 = vadd.s32 %v173, 272
        %v208 = vadd.s32 %v173, 280
        %v209 = vadd.s32 %v173, 288
        %v210 = vadd.s32 %v173, 296
        %v211 = vadd.s32 %v173, 304
        %v212 = vadd.s32 %v173, 312
        %v213 = vadd.s32 %v173, 320
        %v214 = vadd.s32 %v173, 328
        %v215 = vadd.s32 %v173, 336
        %v216 = vadd.s32 %v173, 344
        %v217 = vadd.s32 %v173, 352
        %v218 = vadd.s32 %v173, 360
        %v219 = vadd.s32 %v173, 368
        %v220 = vadd.s32 %v173, 376
        %v221 = vadd.s32 %v173, 384
        %v222 = vadd.s32 %v173, 392
        %v223 = vadd.s32 %v173, 400
        %v224 = vadd.s32 %v173, 408
        %v225 = vadd.s32 %v173, 416
        %v226 = vadd.s32 %v173, 424
        %v227 = vadd.s32 %v173, 432
        %v228 = vadd.s32 %v173, 440
        %v229 = vadd.s32 %v173, 448
        %v230 = vadd.s32 %v173, 456
        %v231 = vadd.s32 %v173, 464
        %v232 = vadd.s32 %v173, 472
        %v233 = vadd.s32 %v173, 480
        %v234 = vadd.s32 %v173, 488
        %v235 = vadd.s32 %v173, 496
        %v236 = vadd.s32 %v173, 504
        %v237 = vlaneseq
        %v238 = vand.u32 %v237, 127
        %v239 = vadd.s32 %v238, 128
        %v240 = vadd.s32 %v238, 256
        %v241 = vadd.s32 %v238, 384
        %v242 = vsub.s32 %v173, %v238
        %v243 = vsub.s32 %v173, %v239
        %v244 = vsub.s32 %v173, %v240
        %v245 = vsub.s32 %v173, %v241
        %v246 = vsub.s32 %v174, %v238
        %v247 = vsub.s32 %v174, %v239
        %v248 = vsub.s32 %v174, %v240
        %v249 = vsub.s32 %v174, %v241
        %v250 = vsub.s32 %v175, %v238
        %v251 = vsub.s32 %v175, %v239
        %v252 = vsub.s32 %v175, %v240
        %v253 = vsub.s32 %v175, %v241
        %v254 = vsub.s32 %v176, %v238
        %v255 = vsub.s32 %v176, %v239
        %v256 = vsub.s32 %v176, %v240
        %v257 = vsub.s32 %v176, %v241
        %v258 = vsub.s32 %v177, %v238
        %v259 = vsub.s32 %v177, %v239
        %v260 = vsub.s32 %v177, %v240
        %v261 = vsub.s32 %v177, %v241
        %v262 = vsub.s32 %v178, %v238
        %v263 = vsub.s32 %v178, %v239
        %v264 = vsub.s32 %v178, %v240
        %v265 = vsub.s32 %v178, %v241
        %v266 = vsub.s32 %v179, %v238
        %v267 = vsub.s32 %v179, %v239
        %v268 = vsub.s32 %v179, %v240
        %v269 = vsub.s32 %v179, %v241
        %v270 = vsub.s32 %v180, %v238
        %v271 = vsub.s32 %v180, %v239
        %v272 = vsub.s32 %v180, %v240
        %v273 = vsub.s32 %v180, %v241
        %v274 = vsub.s32 %v181, %v238
        %v275 = vsub.s32 %v181, %v239
        %v276 = vsub.s32 %v181, %v240
        %v277 = vsub.s32 %v181, %v241
        %v278 = vsub.s32 %v182, %v238
        %v279 = vsub.s32 %v182, %v239
        %v280 = vsub.s32 %v182, %v240
        %v281 = vsub.s32 %v182, %v241
        %v282 = vsub.s32 %v183, %v238
        %v283 = vsub.s32 %v183, %v239
        %v284 = vsub.s32 %v183, %v240
        %v285 = vsub.s32 %v183, %v241
        %v286 = vsub.s32 %v184, %v238
        %v287 = vsub.s32 %v184, %v239
        %v288 = vsub.s32 %v184, %v240
        %v289 = vsub.s32 %v184, %v241
        %v290 = vsub.s32 %v185, %v238
        %v291 = vsub.s32 %v185, %v239
        %v292 = vsub.s32 %v185, %v240
        %v293 = vsub.s32 %v185, %v241
        %v294 = vsub.s32 %v186, %v238
        %v295 = vsub.s32 %v186, %v239
        %v296 = vsub.s32 %v186, %v240
        %v297 = vsub.s32 %v186, %v241
        %v298 = vsub.s32 %v187, %v238
        %v299 = vsub.s32 %v187, %v239
        %v300 = vsub.s32 %v187, %v240
        %v301 = vsub.s32 %v187, %v241
        %v302 = vsub.s32 %v188, %v238
        %v303 = vsub.s32 %v188, %v239
        %v304 = vsub.s32 %v188, %v240
        %v305 = vsub.s32 %v188, %v241
        %v306 = vsub.s32 %v189, %v238
        %v307 = vsub.s32 %v189, %v239
        %v308 = vsub.s32 %v189, %v240
        %v309 = vsub.s32 %v189, %v241
        %v310 = vsub.s32 %v190, %v238
        %v311 = vsub.s32 %v190, %v239
        %v312 = vsub.s32 %v190, %v240
        %v313 = vsub.s32 %v190, %v241
        %v314 = vsub.s32 %v191, %v238
        %v315 = vsub.s32 %v191, %v239
        %v316 = vsub.s32 %v191, %v240
        %v317 = vsub.s32 %v191, %v241
        %v318 = vsub.s32 %v192, %v238
        %v319 = vsub.s32 %v192, %v239
        %v320 = vsub.s32 %v192, %v240
        %v321 = vsub.s32 %v192, %v241
        %v322 = vsub.s32 %v193, %v238
        %v323 = vsub.s32 %v193, %v239
        %v324 = vsub.s32 %v193, %v240
        %v325 = vsub.s32 %v193, %v241
        %v326 = vsub.s32 %v194, %v238
        %v327 = vsub.s32 %v194, %v239
        %v328 = vsub.s32 %v194, %v240
        %v329 = vsub.s32 %v194, %v241
        %v330 = vsub.s32 %v195, %v238
        %v331 = vsub.s32 %v195, %v239
        %v332 = vsub.s32 %v195, %v240
        %v333 = vsub.s32 %v195, %v241
        %v334 = vsub.s32 %v196, %v238
        %v335 = vsub.s32 %v196, %v239
        %v336 = vsub.s32 %v196, %v240
        %v337 = vsub.s32 %v196, %v241
        %v338 = vsub.s32 %v197, %v238
        %v339 = vsub.s32 %v197, %v239
        %v340 = vsub.s32 %v197, %v240
        %v341 = vsub.s32 %v197, %v241
        %v342 = vsub.s32 %v198, %v238
        %v343 = vsub.s32 %v198, %v239
        %v344 = vsub.s32 %v198, %v240
        %v345 = vsub.s32 %v198, %v241
        %v346 = vsub.s32 %v199, %v238
        %v347 = vsub.s32 %v199, %v239
        %v348 = vsub.s32 %v199, %v240
        %v349 = vsub.s32 %v199, %v241
        %v350 = vsub.s32 %v200, %v238
        %v351 = vsub.s32 %v200, %v239
        %v352 = vsub.s32 %v200, %v240
        %v353 = vsub.s32 %v200, %v241
        %v354 = vsub.s32 %v201, %v238
        %v355 = vsub.s32 %v201, %v239
        %v356 = vsub.s32 %v201, %v240
        %v357 = vsub.s32 %v201, %v241
        %v358 = vsub.s32 %v202, %v238
        %v359 = vsub.s32 %v202, %v239
        %v360 = vsub.s32 %v202, %v240
        %v361 = vsub.s32 %v202, %v241
        %v362 = vsub.s32 %v203, %v238
        %v363 = vsub.s32 %v203, %v239
        %v364 = vsub.s32 %v203, %v240
        %v365 = vsub.s32 %v203, %v241
        %v366 = vsub.s32 %v204, %v238
        %v367 = vsub.s32 %v204, %v239
        %v368 = vsub.s32 %v204, %v240
        %v369 = vsub.s32 %v204, %v241
        %v370 = vsub.s32 %v205, %v238
        %v371 = vsub.s32 %v205, %v239
        %v372 = vsub.s32 %v205, %v240
        %v373 = vsub.s32 %v205, %v241
        %v374 = vsub.s32 %v206, %v238
        %v375 = vsub.s32 %v206, %v239
        %v376 = vsub.s32 %v206, %v240
        %v377 = vsub.s32 %v206, %v241
        %v378 = vsub.s32 %v207, %v238
        %v379 = vsub.s32 %v207, %v239
        %v380 = vsub.s32 %v207, %v240
        %v381 = vsub.s32 %v207, %v241
        %v382 = vsub.s32 %v208, %v238
        %v383 = vsub.s32 %v208, %v239
        %v384 = vsub.s32 %v208, %v240
        %v385 = vsub.s32 %v208, %v241
        %v386 = vsub.s32 %v209, %v238
        %v387 = vsub.s32 %v209, %v239
        %v388 = vsub.s32 %v209, %v240
        %v389 = vsub.s32 %v209, %v241
        %v390 = vsub.s32 %v210, %v238
        %v391 = vsub.s32 %v210, %v239
        %v392 = vsub.s32 %v210, %v240
        %v393 = vsub.s32 %v210, %v241
        %v394 = vsub.s32 %v211, %v238
        %v395 = vsub.s32 %v211, %v239
        %v396 = vsub.s32 %v211, %v240
        %v397 = vsub.s32 %v211, %v241
        %v398 = vsub.s32 %v212, %v238
        %v399 = vsub.s32 %v212, %v239
        %v400 = vsub.s32 %v212, %v240
        %v401 = vsub.s32 %v212, %v241
        %v402 = vsub.s32 %v213, %v238
        %v403 = vsub.s32 %v213, %v239
        %v404 = vsub.s32 %v213, %v240
        %v405 = vsub.s32 %v213, %v241
        %v406 = vsub.s32 %v214, %v238
        %v407 = vsub.s32 %v214, %v239
        %v408 = vsub.s32 %v214, %v240
        %v409 = vsub.s32 %v214, %v241
        %v410 = vsub.s32 %v215, %v238
        %v411 = vsub.s32 %v215, %v239
        %v412 = vsub.s32 %v215, %v240
        %v413 = vsub.s32 %v215, %v241
        %v414 = vsub.s32 %v216, %v238
        %v415 = vsub.s32 %v216, %v239
        %v416 = vsub.s32 %v216, %v240
        %v417 = vsub.s32 %v216, %v241
        %v418 = vsub.s32 %v217, %v238
        %v419 = vsub.s32 %v217, %v239
        %v420 = vsub.s32 %v217, %v240
        %v421 = vsub.s32 %v217, %v241
        %v422 = vsub.s32 %v218, %v238
        %v423 = vsub.s32 %v218, %v239
        %v424 = vsub.s32 %v218, %v240
        %v425 = vsub.s32 %v218, %v241
        %v426 = vsub.s32 %v219, %v238
        %v427 = vsub.s32 %v219, %v239
        %v428 = vsub.s32 %v219, %v240
        %v429 = vsub.s32 %v219, %v241
        %v430 = vsub.s32 %v220, %v238
        %v431 = vsub.s32 %v220, %v239
        %v432 = vsub.s32 %v220, %v240
        %v433 = vsub.s32 %v220, %v241
        %v434 = vsub.s32 %v221, %v238
        %v435 = vsub.s32 %v221, %v239
        %v436 = vsub.s32 %v221, %v240
        %v437 = vsub.s32 %v221, %v241
        %v438 = vsub.s32 %v222, %v238
        %v439 = vsub.s32 %v222, %v239
        %v440 = vsub.s32 %v222, %v240
        %v441 = vsub.s32 %v222, %v241
        %v442 = vsub.s32 %v223, %v238
        %v443 = vsub.s32 %v223, %v239
        %v444 = vsub.s32 %v223, %v240
        %v445 = vsub.s32 %v223, %v241
        %v446 = vsub.s32 %v224, %v238
        %v447 = vsub.s32 %v224, %v239
        %v448 = vsub.s32 %v224, %v240
        %v449 = vsub.s32 %v224, %v241
        %v450 = vsub.s32 %v225, %v238
        %v451 = vsub.s32 %v225, %v239
        %v452 = vsub.s32 %v225, %v240
        %v453 = vsub.s32 %v225, %v241
        %v454 = vsub.s32 %v226, %v238
        %v455 = vsub.s32 %v226, %v239
        %v456 = vsub.s32 %v226, %v240
        %v457 = vsub.s32 %v226, %v241
        %v458 = vsub.s32 %v227, %v238
        %v459 = vsub.s32 %v227, %v239
        %v460 = vsub.s32 %v227, %v240
        %v461 = vsub.s32 %v227, %v241
        %v462 = vsub.s32 %v228, %v238
        %v463 = vsub.s32 %v228, %v239
        %v464 = vsub.s32 %v228, %v240
        %v465 = vsub.s32 %v228, %v241
        %v466 = vsub.s32 %v229, %v238
        %v467 = vsub.s32 %v229, %v239
        %v468 = vsub.s32 %v229, %v240
        %v469 = vsub.s32 %v229, %v241
        %v470 = vsub.s32 %v230, %v238
        %v471 = vsub.s32 %v230, %v239
        %v472 = vsub.s32 %v230, %v240
        %v473 = vsub.s32 %v230, %v241
        %v474 = vsub.s32 %v231, %v238
        %v475 = vsub.s32 %v231, %v239
        %v476 = vsub.s32 %v231, %v240
        %v477 = vsub.s32 %v231, %v241
        %v478 = vsub.s32 %v232, %v238
        %v479 = vsub.s32 %v232, %v239
        %v480 = vsub.s32 %v232, %v240
        %v481 = vsub.s32 %v232, %v241
        %v482 = vsub.s32 %v233, %v238
        %v483 = vsub.s32 %v233, %v239
        %v484 = vsub.s32 %v233, %v240
        %v485 = vsub.s32 %v233, %v241
        %v486 = vsub.s32 %v234, %v238
        %v487 = vsub.s32 %v234, %v239
        %v488 = vsub.s32 %v234, %v240
        %v489 = vsub.s32 %v234, %v241
        %v490 = vsub.s32 %v235, %v238
        %v491 = vsub.s32 %v235, %v239
        %v492 = vsub.s32 %v235, %v240
        %v493 = vsub.s32 %v235, %v241
        %v494 = vsub.s32 %v236, %v238
        %v495 = vsub.s32 %v236, %v239
        %v496 = vsub.s32 %v236, %v240
        %v497 = vsub.s32 %v236, %v241
        %vm498 = vcmp.lt.s32.totalorder %v242, 0
        %v499 = vsub.s32 0, %v242
        %v500 = vsel %vm498, %v499, %v242
        %vm501 = vcmp.lt.s32.totalorder %v243, 0
        %v502 = vsub.s32 0, %v243
        %v503 = vsel %vm501, %v502, %v243
        %vm504 = vcmp.lt.s32.totalorder %v244, 0
        %v505 = vsub.s32 0, %v244
        %v506 = vsel %vm504, %v505, %v244
        %vm507 = vcmp.lt.s32.totalorder %v245, 0
        %v508 = vsub.s32 0, %v245
        %v509 = vsel %vm507, %v508, %v245
        %vm510 = vcmp.lt.s32.totalorder %v246, 0
        %v511 = vsub.s32 0, %v246
        %v512 = vsel %vm510, %v511, %v246
        %vm513 = vcmp.lt.s32.totalorder %v247, 0
        %v514 = vsub.s32 0, %v247
        %v515 = vsel %vm513, %v514, %v247
        %vm516 = vcmp.lt.s32.totalorder %v248, 0
        %v517 = vsub.s32 0, %v248
        %v518 = vsel %vm516, %v517, %v248
        %vm519 = vcmp.lt.s32.totalorder %v249, 0
        %v520 = vsub.s32 0, %v249
        %v521 = vsel %vm519, %v520, %v249
        %vm522 = vcmp.lt.s32.totalorder %v250, 0
        %v523 = vsub.s32 0, %v250
        %v524 = vsel %vm522, %v523, %v250
        %vm525 = vcmp.lt.s32.totalorder %v251, 0
        %v526 = vsub.s32 0, %v251
        %v527 = vsel %vm525, %v526, %v251
        %vm528 = vcmp.lt.s32.totalorder %v252, 0
        %v529 = vsub.s32 0, %v252
        %v530 = vsel %vm528, %v529, %v252
        %vm531 = vcmp.lt.s32.totalorder %v253, 0
        %v532 = vsub.s32 0, %v253
        %v533 = vsel %vm531, %v532, %v253
        %vm534 = vcmp.lt.s32.totalorder %v254, 0
        %v535 = vsub.s32 0, %v254
        %v536 = vsel %vm534, %v535, %v254
        %vm537 = vcmp.lt.s32.totalorder %v255, 0
        %v538 = vsub.s32 0, %v255
        %v539 = vsel %vm537, %v538, %v255
        %vm540 = vcmp.lt.s32.totalorder %v256, 0
        %v541 = vsub.s32 0, %v256
        %v542 = vsel %vm540, %v541, %v256
        %vm543 = vcmp.lt.s32.totalorder %v257, 0
        %v544 = vsub.s32 0, %v257
        %v545 = vsel %vm543, %v544, %v257
        %vm546 = vcmp.lt.s32.totalorder %v258, 0
        %v547 = vsub.s32 0, %v258
        %v548 = vsel %vm546, %v547, %v258
        %vm549 = vcmp.lt.s32.totalorder %v259, 0
        %v550 = vsub.s32 0, %v259
        %v551 = vsel %vm549, %v550, %v259
        %vm552 = vcmp.lt.s32.totalorder %v260, 0
        %v553 = vsub.s32 0, %v260
        %v554 = vsel %vm552, %v553, %v260
        %vm555 = vcmp.lt.s32.totalorder %v261, 0
        %v556 = vsub.s32 0, %v261
        %v557 = vsel %vm555, %v556, %v261
        %vm558 = vcmp.lt.s32.totalorder %v262, 0
        %v559 = vsub.s32 0, %v262
        %v560 = vsel %vm558, %v559, %v262
        %vm561 = vcmp.lt.s32.totalorder %v263, 0
        %v562 = vsub.s32 0, %v263
        %v563 = vsel %vm561, %v562, %v263
        %vm564 = vcmp.lt.s32.totalorder %v264, 0
        %v565 = vsub.s32 0, %v264
        %v566 = vsel %vm564, %v565, %v264
        %vm567 = vcmp.lt.s32.totalorder %v265, 0
        %v568 = vsub.s32 0, %v265
        %v569 = vsel %vm567, %v568, %v265
        %vm570 = vcmp.lt.s32.totalorder %v266, 0
        %v571 = vsub.s32 0, %v266
        %v572 = vsel %vm570, %v571, %v266
        %vm573 = vcmp.lt.s32.totalorder %v267, 0
        %v574 = vsub.s32 0, %v267
        %v575 = vsel %vm573, %v574, %v267
        %vm576 = vcmp.lt.s32.totalorder %v268, 0
        %v577 = vsub.s32 0, %v268
        %v578 = vsel %vm576, %v577, %v268
        %vm579 = vcmp.lt.s32.totalorder %v269, 0
        %v580 = vsub.s32 0, %v269
        %v581 = vsel %vm579, %v580, %v269
        %vm582 = vcmp.lt.s32.totalorder %v270, 0
        %v583 = vsub.s32 0, %v270
        %v584 = vsel %vm582, %v583, %v270
        %vm585 = vcmp.lt.s32.totalorder %v271, 0
        %v586 = vsub.s32 0, %v271
        %v587 = vsel %vm585, %v586, %v271
        %vm588 = vcmp.lt.s32.totalorder %v272, 0
        %v589 = vsub.s32 0, %v272
        %v590 = vsel %vm588, %v589, %v272
        %vm591 = vcmp.lt.s32.totalorder %v273, 0
        %v592 = vsub.s32 0, %v273
        %v593 = vsel %vm591, %v592, %v273
        %vm594 = vcmp.lt.s32.totalorder %v274, 0
        %v595 = vsub.s32 0, %v274
        %v596 = vsel %vm594, %v595, %v274
        %vm597 = vcmp.lt.s32.totalorder %v275, 0
        %v598 = vsub.s32 0, %v275
        %v599 = vsel %vm597, %v598, %v275
        %vm600 = vcmp.lt.s32.totalorder %v276, 0
        %v601 = vsub.s32 0, %v276
        %v602 = vsel %vm600, %v601, %v276
        %vm603 = vcmp.lt.s32.totalorder %v277, 0
        %v604 = vsub.s32 0, %v277
        %v605 = vsel %vm603, %v604, %v277
        %vm606 = vcmp.lt.s32.totalorder %v278, 0
        %v607 = vsub.s32 0, %v278
        %v608 = vsel %vm606, %v607, %v278
        %vm609 = vcmp.lt.s32.totalorder %v279, 0
        %v610 = vsub.s32 0, %v279
        %v611 = vsel %vm609, %v610, %v279
        %vm612 = vcmp.lt.s32.totalorder %v280, 0
        %v613 = vsub.s32 0, %v280
        %v614 = vsel %vm612, %v613, %v280
        %vm615 = vcmp.lt.s32.totalorder %v281, 0
        %v616 = vsub.s32 0, %v281
        %v617 = vsel %vm615, %v616, %v281
        %vm618 = vcmp.lt.s32.totalorder %v282, 0
        %v619 = vsub.s32 0, %v282
        %v620 = vsel %vm618, %v619, %v282
        %vm621 = vcmp.lt.s32.totalorder %v283, 0
        %v622 = vsub.s32 0, %v283
        %v623 = vsel %vm621, %v622, %v283
        %vm624 = vcmp.lt.s32.totalorder %v284, 0
        %v625 = vsub.s32 0, %v284
        %v626 = vsel %vm624, %v625, %v284
        %vm627 = vcmp.lt.s32.totalorder %v285, 0
        %v628 = vsub.s32 0, %v285
        %v629 = vsel %vm627, %v628, %v285
        %vm630 = vcmp.lt.s32.totalorder %v286, 0
        %v631 = vsub.s32 0, %v286
        %v632 = vsel %vm630, %v631, %v286
        %vm633 = vcmp.lt.s32.totalorder %v287, 0
        %v634 = vsub.s32 0, %v287
        %v635 = vsel %vm633, %v634, %v287
        %vm636 = vcmp.lt.s32.totalorder %v288, 0
        %v637 = vsub.s32 0, %v288
        %v638 = vsel %vm636, %v637, %v288
        %vm639 = vcmp.lt.s32.totalorder %v289, 0
        %v640 = vsub.s32 0, %v289
        %v641 = vsel %vm639, %v640, %v289
        %vm642 = vcmp.lt.s32.totalorder %v290, 0
        %v643 = vsub.s32 0, %v290
        %v644 = vsel %vm642, %v643, %v290
        %vm645 = vcmp.lt.s32.totalorder %v291, 0
        %v646 = vsub.s32 0, %v291
        %v647 = vsel %vm645, %v646, %v291
        %vm648 = vcmp.lt.s32.totalorder %v292, 0
        %v649 = vsub.s32 0, %v292
        %v650 = vsel %vm648, %v649, %v292
        %vm651 = vcmp.lt.s32.totalorder %v293, 0
        %v652 = vsub.s32 0, %v293
        %v653 = vsel %vm651, %v652, %v293
        %vm654 = vcmp.lt.s32.totalorder %v294, 0
        %v655 = vsub.s32 0, %v294
        %v656 = vsel %vm654, %v655, %v294
        %vm657 = vcmp.lt.s32.totalorder %v295, 0
        %v658 = vsub.s32 0, %v295
        %v659 = vsel %vm657, %v658, %v295
        %vm660 = vcmp.lt.s32.totalorder %v296, 0
        %v661 = vsub.s32 0, %v296
        %v662 = vsel %vm660, %v661, %v296
        %vm663 = vcmp.lt.s32.totalorder %v297, 0
        %v664 = vsub.s32 0, %v297
        %v665 = vsel %vm663, %v664, %v297
        %vm666 = vcmp.lt.s32.totalorder %v298, 0
        %v667 = vsub.s32 0, %v298
        %v668 = vsel %vm666, %v667, %v298
        %vm669 = vcmp.lt.s32.totalorder %v299, 0
        %v670 = vsub.s32 0, %v299
        %v671 = vsel %vm669, %v670, %v299
        %vm672 = vcmp.lt.s32.totalorder %v300, 0
        %v673 = vsub.s32 0, %v300
        %v674 = vsel %vm672, %v673, %v300
        %vm675 = vcmp.lt.s32.totalorder %v301, 0
        %v676 = vsub.s32 0, %v301
        %v677 = vsel %vm675, %v676, %v301
        %vm678 = vcmp.lt.s32.totalorder %v302, 0
        %v679 = vsub.s32 0, %v302
        %v680 = vsel %vm678, %v679, %v302
        %vm681 = vcmp.lt.s32.totalorder %v303, 0
        %v682 = vsub.s32 0, %v303
        %v683 = vsel %vm681, %v682, %v303
        %vm684 = vcmp.lt.s32.totalorder %v304, 0
        %v685 = vsub.s32 0, %v304
        %v686 = vsel %vm684, %v685, %v304
        %vm687 = vcmp.lt.s32.totalorder %v305, 0
        %v688 = vsub.s32 0, %v305
        %v689 = vsel %vm687, %v688, %v305
        %vm690 = vcmp.lt.s32.totalorder %v306, 0
        %v691 = vsub.s32 0, %v306
        %v692 = vsel %vm690, %v691, %v306
        %vm693 = vcmp.lt.s32.totalorder %v307, 0
        %v694 = vsub.s32 0, %v307
        %v695 = vsel %vm693, %v694, %v307
        %vm696 = vcmp.lt.s32.totalorder %v308, 0
        %v697 = vsub.s32 0, %v308
        %v698 = vsel %vm696, %v697, %v308
        %vm699 = vcmp.lt.s32.totalorder %v309, 0
        %v700 = vsub.s32 0, %v309
        %v701 = vsel %vm699, %v700, %v309
        %vm702 = vcmp.lt.s32.totalorder %v310, 0
        %v703 = vsub.s32 0, %v310
        %v704 = vsel %vm702, %v703, %v310
        %vm705 = vcmp.lt.s32.totalorder %v311, 0
        %v706 = vsub.s32 0, %v311
        %v707 = vsel %vm705, %v706, %v311
        %vm708 = vcmp.lt.s32.totalorder %v312, 0
        %v709 = vsub.s32 0, %v312
        %v710 = vsel %vm708, %v709, %v312
        %vm711 = vcmp.lt.s32.totalorder %v313, 0
        %v712 = vsub.s32 0, %v313
        %v713 = vsel %vm711, %v712, %v313
        %vm714 = vcmp.lt.s32.totalorder %v314, 0
        %v715 = vsub.s32 0, %v314
        %v716 = vsel %vm714, %v715, %v314
        %vm717 = vcmp.lt.s32.totalorder %v315, 0
        %v718 = vsub.s32 0, %v315
        %v719 = vsel %vm717, %v718, %v315
        %vm720 = vcmp.lt.s32.totalorder %v316, 0
        %v721 = vsub.s32 0, %v316
        %v722 = vsel %vm720, %v721, %v316
        %vm723 = vcmp.lt.s32.totalorder %v317, 0
        %v724 = vsub.s32 0, %v317
        %v725 = vsel %vm723, %v724, %v317
        %vm726 = vcmp.lt.s32.totalorder %v318, 0
        %v727 = vsub.s32 0, %v318
        %v728 = vsel %vm726, %v727, %v318
        %vm729 = vcmp.lt.s32.totalorder %v319, 0
        %v730 = vsub.s32 0, %v319
        %v731 = vsel %vm729, %v730, %v319
        %vm732 = vcmp.lt.s32.totalorder %v320, 0
        %v733 = vsub.s32 0, %v320
        %v734 = vsel %vm732, %v733, %v320
        %vm735 = vcmp.lt.s32.totalorder %v321, 0
        %v736 = vsub.s32 0, %v321
        %v737 = vsel %vm735, %v736, %v321
        %vm738 = vcmp.lt.s32.totalorder %v322, 0
        %v739 = vsub.s32 0, %v322
        %v740 = vsel %vm738, %v739, %v322
        %vm741 = vcmp.lt.s32.totalorder %v323, 0
        %v742 = vsub.s32 0, %v323
        %v743 = vsel %vm741, %v742, %v323
        %vm744 = vcmp.lt.s32.totalorder %v324, 0
        %v745 = vsub.s32 0, %v324
        %v746 = vsel %vm744, %v745, %v324
        %vm747 = vcmp.lt.s32.totalorder %v325, 0
        %v748 = vsub.s32 0, %v325
        %v749 = vsel %vm747, %v748, %v325
        %vm750 = vcmp.lt.s32.totalorder %v326, 0
        %v751 = vsub.s32 0, %v326
        %v752 = vsel %vm750, %v751, %v326
        %vm753 = vcmp.lt.s32.totalorder %v327, 0
        %v754 = vsub.s32 0, %v327
        %v755 = vsel %vm753, %v754, %v327
        %vm756 = vcmp.lt.s32.totalorder %v328, 0
        %v757 = vsub.s32 0, %v328
        %v758 = vsel %vm756, %v757, %v328
        %vm759 = vcmp.lt.s32.totalorder %v329, 0
        %v760 = vsub.s32 0, %v329
        %v761 = vsel %vm759, %v760, %v329
        %vm762 = vcmp.lt.s32.totalorder %v330, 0
        %v763 = vsub.s32 0, %v330
        %v764 = vsel %vm762, %v763, %v330
        %vm765 = vcmp.lt.s32.totalorder %v331, 0
        %v766 = vsub.s32 0, %v331
        %v767 = vsel %vm765, %v766, %v331
        %vm768 = vcmp.lt.s32.totalorder %v332, 0
        %v769 = vsub.s32 0, %v332
        %v770 = vsel %vm768, %v769, %v332
        %vm771 = vcmp.lt.s32.totalorder %v333, 0
        %v772 = vsub.s32 0, %v333
        %v773 = vsel %vm771, %v772, %v333
        %vm774 = vcmp.lt.s32.totalorder %v334, 0
        %v775 = vsub.s32 0, %v334
        %v776 = vsel %vm774, %v775, %v334
        %vm777 = vcmp.lt.s32.totalorder %v335, 0
        %v778 = vsub.s32 0, %v335
        %v779 = vsel %vm777, %v778, %v335
        %vm780 = vcmp.lt.s32.totalorder %v336, 0
        %v781 = vsub.s32 0, %v336
        %v782 = vsel %vm780, %v781, %v336
        %vm783 = vcmp.lt.s32.totalorder %v337, 0
        %v784 = vsub.s32 0, %v337
        %v785 = vsel %vm783, %v784, %v337
        %vm786 = vcmp.lt.s32.totalorder %v338, 0
        %v787 = vsub.s32 0, %v338
        %v788 = vsel %vm786, %v787, %v338
        %vm789 = vcmp.lt.s32.totalorder %v339, 0
        %v790 = vsub.s32 0, %v339
        %v791 = vsel %vm789, %v790, %v339
        %vm792 = vcmp.lt.s32.totalorder %v340, 0
        %v793 = vsub.s32 0, %v340
        %v794 = vsel %vm792, %v793, %v340
        %vm795 = vcmp.lt.s32.totalorder %v341, 0
        %v796 = vsub.s32 0, %v341
        %v797 = vsel %vm795, %v796, %v341
        %vm798 = vcmp.lt.s32.totalorder %v342, 0
        %v799 = vsub.s32 0, %v342
        %v800 = vsel %vm798, %v799, %v342
        %vm801 = vcmp.lt.s32.totalorder %v343, 0
        %v802 = vsub.s32 0, %v343
        %v803 = vsel %vm801, %v802, %v343
        %vm804 = vcmp.lt.s32.totalorder %v344, 0
        %v805 = vsub.s32 0, %v344
        %v806 = vsel %vm804, %v805, %v344
        %vm807 = vcmp.lt.s32.totalorder %v345, 0
        %v808 = vsub.s32 0, %v345
        %v809 = vsel %vm807, %v808, %v345
        %vm810 = vcmp.lt.s32.totalorder %v346, 0
        %v811 = vsub.s32 0, %v346
        %v812 = vsel %vm810, %v811, %v346
        %vm813 = vcmp.lt.s32.totalorder %v347, 0
        %v814 = vsub.s32 0, %v347
        %v815 = vsel %vm813, %v814, %v347
        %vm816 = vcmp.lt.s32.totalorder %v348, 0
        %v817 = vsub.s32 0, %v348
        %v818 = vsel %vm816, %v817, %v348
        %vm819 = vcmp.lt.s32.totalorder %v349, 0
        %v820 = vsub.s32 0, %v349
        %v821 = vsel %vm819, %v820, %v349
        %vm822 = vcmp.lt.s32.totalorder %v350, 0
        %v823 = vsub.s32 0, %v350
        %v824 = vsel %vm822, %v823, %v350
        %vm825 = vcmp.lt.s32.totalorder %v351, 0
        %v826 = vsub.s32 0, %v351
        %v827 = vsel %vm825, %v826, %v351
        %vm828 = vcmp.lt.s32.totalorder %v352, 0
        %v829 = vsub.s32 0, %v352
        %v830 = vsel %vm828, %v829, %v352
        %vm831 = vcmp.lt.s32.totalorder %v353, 0
        %v832 = vsub.s32 0, %v353
        %v833 = vsel %vm831, %v832, %v353
        %vm834 = vcmp.lt.s32.totalorder %v354, 0
        %v835 = vsub.s32 0, %v354
        %v836 = vsel %vm834, %v835, %v354
        %vm837 = vcmp.lt.s32.totalorder %v355, 0
        %v838 = vsub.s32 0, %v355
        %v839 = vsel %vm837, %v838, %v355
        %vm840 = vcmp.lt.s32.totalorder %v356, 0
        %v841 = vsub.s32 0, %v356
        %v842 = vsel %vm840, %v841, %v356
        %vm843 = vcmp.lt.s32.totalorder %v357, 0
        %v844 = vsub.s32 0, %v357
        %v845 = vsel %vm843, %v844, %v357
        %vm846 = vcmp.lt.s32.totalorder %v358, 0
        %v847 = vsub.s32 0, %v358
        %v848 = vsel %vm846, %v847, %v358
        %vm849 = vcmp.lt.s32.totalorder %v359, 0
        %v850 = vsub.s32 0, %v359
        %v851 = vsel %vm849, %v850, %v359
        %vm852 = vcmp.lt.s32.totalorder %v360, 0
        %v853 = vsub.s32 0, %v360
        %v854 = vsel %vm852, %v853, %v360
        %vm855 = vcmp.lt.s32.totalorder %v361, 0
        %v856 = vsub.s32 0, %v361
        %v857 = vsel %vm855, %v856, %v361
        %vm858 = vcmp.lt.s32.totalorder %v362, 0
        %v859 = vsub.s32 0, %v362
        %v860 = vsel %vm858, %v859, %v362
        %vm861 = vcmp.lt.s32.totalorder %v363, 0
        %v862 = vsub.s32 0, %v363
        %v863 = vsel %vm861, %v862, %v363
        %vm864 = vcmp.lt.s32.totalorder %v364, 0
        %v865 = vsub.s32 0, %v364
        %v866 = vsel %vm864, %v865, %v364
        %vm867 = vcmp.lt.s32.totalorder %v365, 0
        %v868 = vsub.s32 0, %v365
        %v869 = vsel %vm867, %v868, %v365
        %vm870 = vcmp.lt.s32.totalorder %v366, 0
        %v871 = vsub.s32 0, %v366
        %v872 = vsel %vm870, %v871, %v366
        %vm873 = vcmp.lt.s32.totalorder %v367, 0
        %v874 = vsub.s32 0, %v367
        %v875 = vsel %vm873, %v874, %v367
        %vm876 = vcmp.lt.s32.totalorder %v368, 0
        %v877 = vsub.s32 0, %v368
        %v878 = vsel %vm876, %v877, %v368
        %vm879 = vcmp.lt.s32.totalorder %v369, 0
        %v880 = vsub.s32 0, %v369
        %v881 = vsel %vm879, %v880, %v369
        %vm882 = vcmp.lt.s32.totalorder %v370, 0
        %v883 = vsub.s32 0, %v370
        %v884 = vsel %vm882, %v883, %v370
        %vm885 = vcmp.lt.s32.totalorder %v371, 0
        %v886 = vsub.s32 0, %v371
        %v887 = vsel %vm885, %v886, %v371
        %vm888 = vcmp.lt.s32.totalorder %v372, 0
        %v889 = vsub.s32 0, %v372
        %v890 = vsel %vm888, %v889, %v372
        %vm891 = vcmp.lt.s32.totalorder %v373, 0
        %v892 = vsub.s32 0, %v373
        %v893 = vsel %vm891, %v892, %v373
        %vm894 = vcmp.lt.s32.totalorder %v374, 0
        %v895 = vsub.s32 0, %v374
        %v896 = vsel %vm894, %v895, %v374
        %vm897 = vcmp.lt.s32.totalorder %v375, 0
        %v898 = vsub.s32 0, %v375
        %v899 = vsel %vm897, %v898, %v375
        %vm900 = vcmp.lt.s32.totalorder %v376, 0
        %v901 = vsub.s32 0, %v376
        %v902 = vsel %vm900, %v901, %v376
        %vm903 = vcmp.lt.s32.totalorder %v377, 0
        %v904 = vsub.s32 0, %v377
        %v905 = vsel %vm903, %v904, %v377
        %vm906 = vcmp.lt.s32.totalorder %v378, 0
        %v907 = vsub.s32 0, %v378
        %v908 = vsel %vm906, %v907, %v378
        %vm909 = vcmp.lt.s32.totalorder %v379, 0
        %v910 = vsub.s32 0, %v379
        %v911 = vsel %vm909, %v910, %v379
        %vm912 = vcmp.lt.s32.totalorder %v380, 0
        %v913 = vsub.s32 0, %v380
        %v914 = vsel %vm912, %v913, %v380
        %vm915 = vcmp.lt.s32.totalorder %v381, 0
        %v916 = vsub.s32 0, %v381
        %v917 = vsel %vm915, %v916, %v381
        %vm918 = vcmp.lt.s32.totalorder %v382, 0
        %v919 = vsub.s32 0, %v382
        %v920 = vsel %vm918, %v919, %v382
        %vm921 = vcmp.lt.s32.totalorder %v383, 0
        %v922 = vsub.s32 0, %v383
        %v923 = vsel %vm921, %v922, %v383
        %vm924 = vcmp.lt.s32.totalorder %v384, 0
        %v925 = vsub.s32 0, %v384
        %v926 = vsel %vm924, %v925, %v384
        %vm927 = vcmp.lt.s32.totalorder %v385, 0
        %v928 = vsub.s32 0, %v385
        %v929 = vsel %vm927, %v928, %v385
        %vm930 = vcmp.lt.s32.totalorder %v386, 0
        %v931 = vsub.s32 0, %v386
        %v932 = vsel %vm930, %v931, %v386
        %vm933 = vcmp.lt.s32.totalorder %v387, 0
        %v934 = vsub.s32 0, %v387
        %v935 = vsel %vm933, %v934, %v387
        %vm936 = vcmp.lt.s32.totalorder %v388, 0
        %v937 = vsub.s32 0, %v388
        %v938 = vsel %vm936, %v937, %v388
        %vm939 = vcmp.lt.s32.totalorder %v389, 0
        %v940 = vsub.s32 0, %v389
        %v941 = vsel %vm939, %v940, %v389
        %vm942 = vcmp.lt.s32.totalorder %v390, 0
        %v943 = vsub.s32 0, %v390
        %v944 = vsel %vm942, %v943, %v390
        %vm945 = vcmp.lt.s32.totalorder %v391, 0
        %v946 = vsub.s32 0, %v391
        %v947 = vsel %vm945, %v946, %v391
        %vm948 = vcmp.lt.s32.totalorder %v392, 0
        %v949 = vsub.s32 0, %v392
        %v950 = vsel %vm948, %v949, %v392
        %vm951 = vcmp.lt.s32.totalorder %v393, 0
        %v952 = vsub.s32 0, %v393
        %v953 = vsel %vm951, %v952, %v393
        %vm954 = vcmp.lt.s32.totalorder %v394, 0
        %v955 = vsub.s32 0, %v394
        %v956 = vsel %vm954, %v955, %v394
        %vm957 = vcmp.lt.s32.totalorder %v395, 0
        %v958 = vsub.s32 0, %v395
        %v959 = vsel %vm957, %v958, %v395
        %vm960 = vcmp.lt.s32.totalorder %v396, 0
        %v961 = vsub.s32 0, %v396
        %v962 = vsel %vm960, %v961, %v396
        %vm963 = vcmp.lt.s32.totalorder %v397, 0
        %v964 = vsub.s32 0, %v397
        %v965 = vsel %vm963, %v964, %v397
        %vm966 = vcmp.lt.s32.totalorder %v398, 0
        %v967 = vsub.s32 0, %v398
        %v968 = vsel %vm966, %v967, %v398
        %vm969 = vcmp.lt.s32.totalorder %v399, 0
        %v970 = vsub.s32 0, %v399
        %v971 = vsel %vm969, %v970, %v399
        %vm972 = vcmp.lt.s32.totalorder %v400, 0
        %v973 = vsub.s32 0, %v400
        %v974 = vsel %vm972, %v973, %v400
        %vm975 = vcmp.lt.s32.totalorder %v401, 0
        %v976 = vsub.s32 0, %v401
        %v977 = vsel %vm975, %v976, %v401
        %vm978 = vcmp.lt.s32.totalorder %v402, 0
        %v979 = vsub.s32 0, %v402
        %v980 = vsel %vm978, %v979, %v402
        %vm981 = vcmp.lt.s32.totalorder %v403, 0
        %v982 = vsub.s32 0, %v403
        %v983 = vsel %vm981, %v982, %v403
        %vm984 = vcmp.lt.s32.totalorder %v404, 0
        %v985 = vsub.s32 0, %v404
        %v986 = vsel %vm984, %v985, %v404
        %vm987 = vcmp.lt.s32.totalorder %v405, 0
        %v988 = vsub.s32 0, %v405
        %v989 = vsel %vm987, %v988, %v405
        %vm990 = vcmp.lt.s32.totalorder %v406, 0
        %v991 = vsub.s32 0, %v406
        %v992 = vsel %vm990, %v991, %v406
        %vm993 = vcmp.lt.s32.totalorder %v407, 0
        %v994 = vsub.s32 0, %v407
        %v995 = vsel %vm993, %v994, %v407
        %vm996 = vcmp.lt.s32.totalorder %v408, 0
        %v997 = vsub.s32 0, %v408
        %v998 = vsel %vm996, %v997, %v408
        %vm999 = vcmp.lt.s32.totalorder %v409, 0
        %v1000 = vsub.s32 0, %v409
        %v1001 = vsel %vm999, %v1000, %v409
        %vm1002 = vcmp.lt.s32.totalorder %v410, 0
        %v1003 = vsub.s32 0, %v410
        %v1004 = vsel %vm1002, %v1003, %v410
        %vm1005 = vcmp.lt.s32.totalorder %v411, 0
        %v1006 = vsub.s32 0, %v411
        %v1007 = vsel %vm1005, %v1006, %v411
        %vm1008 = vcmp.lt.s32.totalorder %v412, 0
        %v1009 = vsub.s32 0, %v412
        %v1010 = vsel %vm1008, %v1009, %v412
        %vm1011 = vcmp.lt.s32.totalorder %v413, 0
        %v1012 = vsub.s32 0, %v413
        %v1013 = vsel %vm1011, %v1012, %v413
        %vm1014 = vcmp.lt.s32.totalorder %v414, 0
        %v1015 = vsub.s32 0, %v414
        %v1016 = vsel %vm1014, %v1015, %v414
        %vm1017 = vcmp.lt.s32.totalorder %v415, 0
        %v1018 = vsub.s32 0, %v415
        %v1019 = vsel %vm1017, %v1018, %v415
        %vm1020 = vcmp.lt.s32.totalorder %v416, 0
        %v1021 = vsub.s32 0, %v416
        %v1022 = vsel %vm1020, %v1021, %v416
        %vm1023 = vcmp.lt.s32.totalorder %v417, 0
        %v1024 = vsub.s32 0, %v417
        %v1025 = vsel %vm1023, %v1024, %v417
        %vm1026 = vcmp.lt.s32.totalorder %v418, 0
        %v1027 = vsub.s32 0, %v418
        %v1028 = vsel %vm1026, %v1027, %v418
        %vm1029 = vcmp.lt.s32.totalorder %v419, 0
        %v1030 = vsub.s32 0, %v419
        %v1031 = vsel %vm1029, %v1030, %v419
        %vm1032 = vcmp.lt.s32.totalorder %v420, 0
        %v1033 = vsub.s32 0, %v420
        %v1034 = vsel %vm1032, %v1033, %v420
        %vm1035 = vcmp.lt.s32.totalorder %v421, 0
        %v1036 = vsub.s32 0, %v421
        %v1037 = vsel %vm1035, %v1036, %v421
        %vm1038 = vcmp.lt.s32.totalorder %v422, 0
        %v1039 = vsub.s32 0, %v422
        %v1040 = vsel %vm1038, %v1039, %v422
        %vm1041 = vcmp.lt.s32.totalorder %v423, 0
        %v1042 = vsub.s32 0, %v423
        %v1043 = vsel %vm1041, %v1042, %v423
        %vm1044 = vcmp.lt.s32.totalorder %v424, 0
        %v1045 = vsub.s32 0, %v424
        %v1046 = vsel %vm1044, %v1045, %v424
        %vm1047 = vcmp.lt.s32.totalorder %v425, 0
        %v1048 = vsub.s32 0, %v425
        %v1049 = vsel %vm1047, %v1048, %v425
        %vm1050 = vcmp.lt.s32.totalorder %v426, 0
        %v1051 = vsub.s32 0, %v426
        %v1052 = vsel %vm1050, %v1051, %v426
        %vm1053 = vcmp.lt.s32.totalorder %v427, 0
        %v1054 = vsub.s32 0, %v427
        %v1055 = vsel %vm1053, %v1054, %v427
        %vm1056 = vcmp.lt.s32.totalorder %v428, 0
        %v1057 = vsub.s32 0, %v428
        %v1058 = vsel %vm1056, %v1057, %v428
        %vm1059 = vcmp.lt.s32.totalorder %v429, 0
        %v1060 = vsub.s32 0, %v429
        %v1061 = vsel %vm1059, %v1060, %v429
        %vm1062 = vcmp.lt.s32.totalorder %v430, 0
        %v1063 = vsub.s32 0, %v430
        %v1064 = vsel %vm1062, %v1063, %v430
        %vm1065 = vcmp.lt.s32.totalorder %v431, 0
        %v1066 = vsub.s32 0, %v431
        %v1067 = vsel %vm1065, %v1066, %v431
        %vm1068 = vcmp.lt.s32.totalorder %v432, 0
        %v1069 = vsub.s32 0, %v432
        %v1070 = vsel %vm1068, %v1069, %v432
        %vm1071 = vcmp.lt.s32.totalorder %v433, 0
        %v1072 = vsub.s32 0, %v433
        %v1073 = vsel %vm1071, %v1072, %v433
        %vm1074 = vcmp.lt.s32.totalorder %v434, 0
        %v1075 = vsub.s32 0, %v434
        %v1076 = vsel %vm1074, %v1075, %v434
        %vm1077 = vcmp.lt.s32.totalorder %v435, 0
        %v1078 = vsub.s32 0, %v435
        %v1079 = vsel %vm1077, %v1078, %v435
        %vm1080 = vcmp.lt.s32.totalorder %v436, 0
        %v1081 = vsub.s32 0, %v436
        %v1082 = vsel %vm1080, %v1081, %v436
        %vm1083 = vcmp.lt.s32.totalorder %v437, 0
        %v1084 = vsub.s32 0, %v437
        %v1085 = vsel %vm1083, %v1084, %v437
        %vm1086 = vcmp.lt.s32.totalorder %v438, 0
        %v1087 = vsub.s32 0, %v438
        %v1088 = vsel %vm1086, %v1087, %v438
        %vm1089 = vcmp.lt.s32.totalorder %v439, 0
        %v1090 = vsub.s32 0, %v439
        %v1091 = vsel %vm1089, %v1090, %v439
        %vm1092 = vcmp.lt.s32.totalorder %v440, 0
        %v1093 = vsub.s32 0, %v440
        %v1094 = vsel %vm1092, %v1093, %v440
        %vm1095 = vcmp.lt.s32.totalorder %v441, 0
        %v1096 = vsub.s32 0, %v441
        %v1097 = vsel %vm1095, %v1096, %v441
        %vm1098 = vcmp.lt.s32.totalorder %v442, 0
        %v1099 = vsub.s32 0, %v442
        %v1100 = vsel %vm1098, %v1099, %v442
        %vm1101 = vcmp.lt.s32.totalorder %v443, 0
        %v1102 = vsub.s32 0, %v443
        %v1103 = vsel %vm1101, %v1102, %v443
        %vm1104 = vcmp.lt.s32.totalorder %v444, 0
        %v1105 = vsub.s32 0, %v444
        %v1106 = vsel %vm1104, %v1105, %v444
        %vm1107 = vcmp.lt.s32.totalorder %v445, 0
        %v1108 = vsub.s32 0, %v445
        %v1109 = vsel %vm1107, %v1108, %v445
        %vm1110 = vcmp.lt.s32.totalorder %v446, 0
        %v1111 = vsub.s32 0, %v446
        %v1112 = vsel %vm1110, %v1111, %v446
        %vm1113 = vcmp.lt.s32.totalorder %v447, 0
        %v1114 = vsub.s32 0, %v447
        %v1115 = vsel %vm1113, %v1114, %v447
        %vm1116 = vcmp.lt.s32.totalorder %v448, 0
        %v1117 = vsub.s32 0, %v448
        %v1118 = vsel %vm1116, %v1117, %v448
        %vm1119 = vcmp.lt.s32.totalorder %v449, 0
        %v1120 = vsub.s32 0, %v449
        %v1121 = vsel %vm1119, %v1120, %v449
        %vm1122 = vcmp.lt.s32.totalorder %v450, 0
        %v1123 = vsub.s32 0, %v450
        %v1124 = vsel %vm1122, %v1123, %v450
        %vm1125 = vcmp.lt.s32.totalorder %v451, 0
        %v1126 = vsub.s32 0, %v451
        %v1127 = vsel %vm1125, %v1126, %v451
        %vm1128 = vcmp.lt.s32.totalorder %v452, 0
        %v1129 = vsub.s32 0, %v452
        %v1130 = vsel %vm1128, %v1129, %v452
        %vm1131 = vcmp.lt.s32.totalorder %v453, 0
        %v1132 = vsub.s32 0, %v453
        %v1133 = vsel %vm1131, %v1132, %v453
        %vm1134 = vcmp.lt.s32.totalorder %v454, 0
        %v1135 = vsub.s32 0, %v454
        %v1136 = vsel %vm1134, %v1135, %v454
        %vm1137 = vcmp.lt.s32.totalorder %v455, 0
        %v1138 = vsub.s32 0, %v455
        %v1139 = vsel %vm1137, %v1138, %v455
        %vm1140 = vcmp.lt.s32.totalorder %v456, 0
        %v1141 = vsub.s32 0, %v456
        %v1142 = vsel %vm1140, %v1141, %v456
        %vm1143 = vcmp.lt.s32.totalorder %v457, 0
        %v1144 = vsub.s32 0, %v457
        %v1145 = vsel %vm1143, %v1144, %v457
        %vm1146 = vcmp.lt.s32.totalorder %v458, 0
        %v1147 = vsub.s32 0, %v458
        %v1148 = vsel %vm1146, %v1147, %v458
        %vm1149 = vcmp.lt.s32.totalorder %v459, 0
        %v1150 = vsub.s32 0, %v459
        %v1151 = vsel %vm1149, %v1150, %v459
        %vm1152 = vcmp.lt.s32.totalorder %v460, 0
        %v1153 = vsub.s32 0, %v460
        %v1154 = vsel %vm1152, %v1153, %v460
        %vm1155 = vcmp.lt.s32.totalorder %v461, 0
        %v1156 = vsub.s32 0, %v461
        %v1157 = vsel %vm1155, %v1156, %v461
        %vm1158 = vcmp.lt.s32.totalorder %v462, 0
        %v1159 = vsub.s32 0, %v462
        %v1160 = vsel %vm1158, %v1159, %v462
        %vm1161 = vcmp.lt.s32.totalorder %v463, 0
        %v1162 = vsub.s32 0, %v463
        %v1163 = vsel %vm1161, %v1162, %v463
        %vm1164 = vcmp.lt.s32.totalorder %v464, 0
        %v1165 = vsub.s32 0, %v464
        %v1166 = vsel %vm1164, %v1165, %v464
        %vm1167 = vcmp.lt.s32.totalorder %v465, 0
        %v1168 = vsub.s32 0, %v465
        %v1169 = vsel %vm1167, %v1168, %v465
        %vm1170 = vcmp.lt.s32.totalorder %v466, 0
        %v1171 = vsub.s32 0, %v466
        %v1172 = vsel %vm1170, %v1171, %v466
        %vm1173 = vcmp.lt.s32.totalorder %v467, 0
        %v1174 = vsub.s32 0, %v467
        %v1175 = vsel %vm1173, %v1174, %v467
        %vm1176 = vcmp.lt.s32.totalorder %v468, 0
        %v1177 = vsub.s32 0, %v468
        %v1178 = vsel %vm1176, %v1177, %v468
        %vm1179 = vcmp.lt.s32.totalorder %v469, 0
        %v1180 = vsub.s32 0, %v469
        %v1181 = vsel %vm1179, %v1180, %v469
        %vm1182 = vcmp.lt.s32.totalorder %v470, 0
        %v1183 = vsub.s32 0, %v470
        %v1184 = vsel %vm1182, %v1183, %v470
        %vm1185 = vcmp.lt.s32.totalorder %v471, 0
        %v1186 = vsub.s32 0, %v471
        %v1187 = vsel %vm1185, %v1186, %v471
        %vm1188 = vcmp.lt.s32.totalorder %v472, 0
        %v1189 = vsub.s32 0, %v472
        %v1190 = vsel %vm1188, %v1189, %v472
        %vm1191 = vcmp.lt.s32.totalorder %v473, 0
        %v1192 = vsub.s32 0, %v473
        %v1193 = vsel %vm1191, %v1192, %v473
        %vm1194 = vcmp.lt.s32.totalorder %v474, 0
        %v1195 = vsub.s32 0, %v474
        %v1196 = vsel %vm1194, %v1195, %v474
        %vm1197 = vcmp.lt.s32.totalorder %v475, 0
        %v1198 = vsub.s32 0, %v475
        %v1199 = vsel %vm1197, %v1198, %v475
        %vm1200 = vcmp.lt.s32.totalorder %v476, 0
        %v1201 = vsub.s32 0, %v476
        %v1202 = vsel %vm1200, %v1201, %v476
        %vm1203 = vcmp.lt.s32.totalorder %v477, 0
        %v1204 = vsub.s32 0, %v477
        %v1205 = vsel %vm1203, %v1204, %v477
        %vm1206 = vcmp.lt.s32.totalorder %v478, 0
        %v1207 = vsub.s32 0, %v478
        %v1208 = vsel %vm1206, %v1207, %v478
        %vm1209 = vcmp.lt.s32.totalorder %v479, 0
        %v1210 = vsub.s32 0, %v479
        %v1211 = vsel %vm1209, %v1210, %v479
        %vm1212 = vcmp.lt.s32.totalorder %v480, 0
        %v1213 = vsub.s32 0, %v480
        %v1214 = vsel %vm1212, %v1213, %v480
        %vm1215 = vcmp.lt.s32.totalorder %v481, 0
        %v1216 = vsub.s32 0, %v481
        %v1217 = vsel %vm1215, %v1216, %v481
        %vm1218 = vcmp.lt.s32.totalorder %v482, 0
        %v1219 = vsub.s32 0, %v482
        %v1220 = vsel %vm1218, %v1219, %v482
        %vm1221 = vcmp.lt.s32.totalorder %v483, 0
        %v1222 = vsub.s32 0, %v483
        %v1223 = vsel %vm1221, %v1222, %v483
        %vm1224 = vcmp.lt.s32.totalorder %v484, 0
        %v1225 = vsub.s32 0, %v484
        %v1226 = vsel %vm1224, %v1225, %v484
        %vm1227 = vcmp.lt.s32.totalorder %v485, 0
        %v1228 = vsub.s32 0, %v485
        %v1229 = vsel %vm1227, %v1228, %v485
        %vm1230 = vcmp.lt.s32.totalorder %v486, 0
        %v1231 = vsub.s32 0, %v486
        %v1232 = vsel %vm1230, %v1231, %v486
        %vm1233 = vcmp.lt.s32.totalorder %v487, 0
        %v1234 = vsub.s32 0, %v487
        %v1235 = vsel %vm1233, %v1234, %v487
        %vm1236 = vcmp.lt.s32.totalorder %v488, 0
        %v1237 = vsub.s32 0, %v488
        %v1238 = vsel %vm1236, %v1237, %v488
        %vm1239 = vcmp.lt.s32.totalorder %v489, 0
        %v1240 = vsub.s32 0, %v489
        %v1241 = vsel %vm1239, %v1240, %v489
        %vm1242 = vcmp.lt.s32.totalorder %v490, 0
        %v1243 = vsub.s32 0, %v490
        %v1244 = vsel %vm1242, %v1243, %v490
        %vm1245 = vcmp.lt.s32.totalorder %v491, 0
        %v1246 = vsub.s32 0, %v491
        %v1247 = vsel %vm1245, %v1246, %v491
        %vm1248 = vcmp.lt.s32.totalorder %v492, 0
        %v1249 = vsub.s32 0, %v492
        %v1250 = vsel %vm1248, %v1249, %v492
        %vm1251 = vcmp.lt.s32.totalorder %v493, 0
        %v1252 = vsub.s32 0, %v493
        %v1253 = vsel %vm1251, %v1252, %v493
        %vm1254 = vcmp.lt.s32.totalorder %v494, 0
        %v1255 = vsub.s32 0, %v494
        %v1256 = vsel %vm1254, %v1255, %v494
        %vm1257 = vcmp.lt.s32.totalorder %v495, 0
        %v1258 = vsub.s32 0, %v495
        %v1259 = vsel %vm1257, %v1258, %v495
        %vm1260 = vcmp.lt.s32.totalorder %v496, 0
        %v1261 = vsub.s32 0, %v496
        %v1262 = vsel %vm1260, %v1261, %v496
        %vm1263 = vcmp.lt.s32.totalorder %v497, 0
        %v1264 = vsub.s32 0, %v497
        %v1265 = vsel %vm1263, %v1264, %v497
        %vm1266 = vcmp.le.s32.totalorder %v500, 125
        %vm1267 = vcmp.le.s32.totalorder %v503, 125
        %vm1268 = vcmp.le.s32.totalorder %v506, 125
        %vm1269 = vcmp.le.s32.totalorder %v509, 125
        %vm1270 = vcmp.le.s32.totalorder %v512, 125
        %vm1271 = vcmp.le.s32.totalorder %v515, 125
        %vm1272 = vcmp.le.s32.totalorder %v518, 125
        %vm1273 = vcmp.le.s32.totalorder %v521, 125
        %vm1274 = vcmp.le.s32.totalorder %v524, 125
        %vm1275 = vcmp.le.s32.totalorder %v527, 125
        %vm1276 = vcmp.le.s32.totalorder %v530, 125
        %vm1277 = vcmp.le.s32.totalorder %v533, 125
        %vm1278 = vcmp.le.s32.totalorder %v536, 125
        %vm1279 = vcmp.le.s32.totalorder %v539, 125
        %vm1280 = vcmp.le.s32.totalorder %v542, 125
        %vm1281 = vcmp.le.s32.totalorder %v545, 125
        %vm1282 = vcmp.le.s32.totalorder %v548, 125
        %vm1283 = vcmp.le.s32.totalorder %v551, 125
        %vm1284 = vcmp.le.s32.totalorder %v554, 125
        %vm1285 = vcmp.le.s32.totalorder %v557, 125
        %vm1286 = vcmp.le.s32.totalorder %v560, 125
        %vm1287 = vcmp.le.s32.totalorder %v563, 125
        %vm1288 = vcmp.le.s32.totalorder %v566, 125
        %vm1289 = vcmp.le.s32.totalorder %v569, 125
        %vm1290 = vcmp.le.s32.totalorder %v572, 125
        %vm1291 = vcmp.le.s32.totalorder %v575, 125
        %vm1292 = vcmp.le.s32.totalorder %v578, 125
        %vm1293 = vcmp.le.s32.totalorder %v581, 125
        %vm1294 = vcmp.le.s32.totalorder %v584, 125
        %vm1295 = vcmp.le.s32.totalorder %v587, 125
        %vm1296 = vcmp.le.s32.totalorder %v590, 125
        %vm1297 = vcmp.le.s32.totalorder %v593, 125
        %vm1298 = vcmp.le.s32.totalorder %v596, 125
        %vm1299 = vcmp.le.s32.totalorder %v599, 125
        %vm1300 = vcmp.le.s32.totalorder %v602, 125
        %vm1301 = vcmp.le.s32.totalorder %v605, 125
        %vm1302 = vcmp.le.s32.totalorder %v608, 125
        %vm1303 = vcmp.le.s32.totalorder %v611, 125
        %vm1304 = vcmp.le.s32.totalorder %v614, 125
        %vm1305 = vcmp.le.s32.totalorder %v617, 125
        %vm1306 = vcmp.le.s32.totalorder %v620, 125
        %vm1307 = vcmp.le.s32.totalorder %v623, 125
        %vm1308 = vcmp.le.s32.totalorder %v626, 125
        %vm1309 = vcmp.le.s32.totalorder %v629, 125
        %vm1310 = vcmp.le.s32.totalorder %v632, 125
        %vm1311 = vcmp.le.s32.totalorder %v635, 125
        %vm1312 = vcmp.le.s32.totalorder %v638, 125
        %vm1313 = vcmp.le.s32.totalorder %v641, 125
        %vm1314 = vcmp.le.s32.totalorder %v644, 125
        %vm1315 = vcmp.le.s32.totalorder %v647, 125
        %vm1316 = vcmp.le.s32.totalorder %v650, 125
        %vm1317 = vcmp.le.s32.totalorder %v653, 125
        %vm1318 = vcmp.le.s32.totalorder %v656, 125
        %vm1319 = vcmp.le.s32.totalorder %v659, 125
        %vm1320 = vcmp.le.s32.totalorder %v662, 125
        %vm1321 = vcmp.le.s32.totalorder %v665, 125
        %vm1322 = vcmp.le.s32.totalorder %v668, 125
        %vm1323 = vcmp.le.s32.totalorder %v671, 125
        %vm1324 = vcmp.le.s32.totalorder %v674, 125
        %vm1325 = vcmp.le.s32.totalorder %v677, 125
        %vm1326 = vcmp.le.s32.totalorder %v680, 125
        %vm1327 = vcmp.le.s32.totalorder %v683, 125
        %vm1328 = vcmp.le.s32.totalorder %v686, 125
        %vm1329 = vcmp.le.s32.totalorder %v689, 125
        %vm1330 = vcmp.le.s32.totalorder %v692, 125
        %vm1331 = vcmp.le.s32.totalorder %v695, 125
        %vm1332 = vcmp.le.s32.totalorder %v698, 125
        %vm1333 = vcmp.le.s32.totalorder %v701, 125
        %vm1334 = vcmp.le.s32.totalorder %v704, 125
        %vm1335 = vcmp.le.s32.totalorder %v707, 125
        %vm1336 = vcmp.le.s32.totalorder %v710, 125
        %vm1337 = vcmp.le.s32.totalorder %v713, 125
        %vm1338 = vcmp.le.s32.totalorder %v716, 125
        %vm1339 = vcmp.le.s32.totalorder %v719, 125
        %vm1340 = vcmp.le.s32.totalorder %v722, 125
        %vm1341 = vcmp.le.s32.totalorder %v725, 125
        %vm1342 = vcmp.le.s32.totalorder %v728, 125
        %vm1343 = vcmp.le.s32.totalorder %v731, 125
        %vm1344 = vcmp.le.s32.totalorder %v734, 125
        %vm1345 = vcmp.le.s32.totalorder %v737, 125
        %vm1346 = vcmp.le.s32.totalorder %v740, 125
        %vm1347 = vcmp.le.s32.totalorder %v743, 125
        %vm1348 = vcmp.le.s32.totalorder %v746, 125
        %vm1349 = vcmp.le.s32.totalorder %v749, 125
        %vm1350 = vcmp.le.s32.totalorder %v752, 125
        %vm1351 = vcmp.le.s32.totalorder %v755, 125
        %vm1352 = vcmp.le.s32.totalorder %v758, 125
        %vm1353 = vcmp.le.s32.totalorder %v761, 125
        %vm1354 = vcmp.le.s32.totalorder %v764, 125
        %vm1355 = vcmp.le.s32.totalorder %v767, 125
        %vm1356 = vcmp.le.s32.totalorder %v770, 125
        %vm1357 = vcmp.le.s32.totalorder %v773, 125
        %vm1358 = vcmp.le.s32.totalorder %v776, 125
        %vm1359 = vcmp.le.s32.totalorder %v779, 125
        %vm1360 = vcmp.le.s32.totalorder %v782, 125
        %vm1361 = vcmp.le.s32.totalorder %v785, 125
        %vm1362 = vcmp.le.s32.totalorder %v788, 125
        %vm1363 = vcmp.le.s32.totalorder %v791, 125
        %vm1364 = vcmp.le.s32.totalorder %v794, 125
        %vm1365 = vcmp.le.s32.totalorder %v797, 125
        %vm1366 = vcmp.le.s32.totalorder %v800, 125
        %vm1367 = vcmp.le.s32.totalorder %v803, 125
        %vm1368 = vcmp.le.s32.totalorder %v806, 125
        %vm1369 = vcmp.le.s32.totalorder %v809, 125
        %vm1370 = vcmp.le.s32.totalorder %v812, 125
        %vm1371 = vcmp.le.s32.totalorder %v815, 125
        %vm1372 = vcmp.le.s32.totalorder %v818, 125
        %vm1373 = vcmp.le.s32.totalorder %v821, 125
        %vm1374 = vcmp.le.s32.totalorder %v824, 125
        %vm1375 = vcmp.le.s32.totalorder %v827, 125
        %vm1376 = vcmp.le.s32.totalorder %v830, 125
        %vm1377 = vcmp.le.s32.totalorder %v833, 125
        %vm1378 = vcmp.le.s32.totalorder %v836, 125
        %vm1379 = vcmp.le.s32.totalorder %v839, 125
        %vm1380 = vcmp.le.s32.totalorder %v842, 125
        %vm1381 = vcmp.le.s32.totalorder %v845, 125
        %vm1382 = vcmp.le.s32.totalorder %v848, 125
        %vm1383 = vcmp.le.s32.totalorder %v851, 125
        %vm1384 = vcmp.le.s32.totalorder %v854, 125
        %vm1385 = vcmp.le.s32.totalorder %v857, 125
        %vm1386 = vcmp.le.s32.totalorder %v860, 125
        %vm1387 = vcmp.le.s32.totalorder %v863, 125
        %vm1388 = vcmp.le.s32.totalorder %v866, 125
        %vm1389 = vcmp.le.s32.totalorder %v869, 125
        %vm1390 = vcmp.le.s32.totalorder %v872, 125
        %vm1391 = vcmp.le.s32.totalorder %v875, 125
        %vm1392 = vcmp.le.s32.totalorder %v878, 125
        %vm1393 = vcmp.le.s32.totalorder %v881, 125
        %vm1394 = vcmp.le.s32.totalorder %v884, 125
        %vm1395 = vcmp.le.s32.totalorder %v887, 125
        %vm1396 = vcmp.le.s32.totalorder %v890, 125
        %vm1397 = vcmp.le.s32.totalorder %v893, 125
        %vm1398 = vcmp.le.s32.totalorder %v896, 125
        %vm1399 = vcmp.le.s32.totalorder %v899, 125
        %vm1400 = vcmp.le.s32.totalorder %v902, 125
        %vm1401 = vcmp.le.s32.totalorder %v905, 125
        %vm1402 = vcmp.le.s32.totalorder %v908, 125
        %vm1403 = vcmp.le.s32.totalorder %v911, 125
        %vm1404 = vcmp.le.s32.totalorder %v914, 125
        %vm1405 = vcmp.le.s32.totalorder %v917, 125
        %vm1406 = vcmp.le.s32.totalorder %v920, 125
        %vm1407 = vcmp.le.s32.totalorder %v923, 125
        %vm1408 = vcmp.le.s32.totalorder %v926, 125
        %vm1409 = vcmp.le.s32.totalorder %v929, 125
        %vm1410 = vcmp.le.s32.totalorder %v932, 125
        %vm1411 = vcmp.le.s32.totalorder %v935, 125
        %vm1412 = vcmp.le.s32.totalorder %v938, 125
        %vm1413 = vcmp.le.s32.totalorder %v941, 125
        %vm1414 = vcmp.le.s32.totalorder %v944, 125
        %vm1415 = vcmp.le.s32.totalorder %v947, 125
        %vm1416 = vcmp.le.s32.totalorder %v950, 125
        %vm1417 = vcmp.le.s32.totalorder %v953, 125
        %vm1418 = vcmp.le.s32.totalorder %v956, 125
        %vm1419 = vcmp.le.s32.totalorder %v959, 125
        %vm1420 = vcmp.le.s32.totalorder %v962, 125
        %vm1421 = vcmp.le.s32.totalorder %v965, 125
        %vm1422 = vcmp.le.s32.totalorder %v968, 125
        %vm1423 = vcmp.le.s32.totalorder %v971, 125
        %vm1424 = vcmp.le.s32.totalorder %v974, 125
        %vm1425 = vcmp.le.s32.totalorder %v977, 125
        %vm1426 = vcmp.le.s32.totalorder %v980, 125
        %vm1427 = vcmp.le.s32.totalorder %v983, 125
        %vm1428 = vcmp.le.s32.totalorder %v986, 125
        %vm1429 = vcmp.le.s32.totalorder %v989, 125
        %vm1430 = vcmp.le.s32.totalorder %v992, 125
        %vm1431 = vcmp.le.s32.totalorder %v995, 125
        %vm1432 = vcmp.le.s32.totalorder %v998, 125
        %vm1433 = vcmp.le.s32.totalorder %v1001, 125
        %vm1434 = vcmp.le.s32.totalorder %v1004, 125
        %vm1435 = vcmp.le.s32.totalorder %v1007, 125
        %vm1436 = vcmp.le.s32.totalorder %v1010, 125
        %vm1437 = vcmp.le.s32.totalorder %v1013, 125
        %vm1438 = vcmp.le.s32.totalorder %v1016, 125
        %vm1439 = vcmp.le.s32.totalorder %v1019, 125
        %vm1440 = vcmp.le.s32.totalorder %v1022, 125
        %vm1441 = vcmp.le.s32.totalorder %v1025, 125
        %vm1442 = vcmp.le.s32.totalorder %v1028, 125
        %vm1443 = vcmp.le.s32.totalorder %v1031, 125
        %vm1444 = vcmp.le.s32.totalorder %v1034, 125
        %vm1445 = vcmp.le.s32.totalorder %v1037, 125
        %vm1446 = vcmp.le.s32.totalorder %v1040, 125
        %vm1447 = vcmp.le.s32.totalorder %v1043, 125
        %vm1448 = vcmp.le.s32.totalorder %v1046, 125
        %vm1449 = vcmp.le.s32.totalorder %v1049, 125
        %vm1450 = vcmp.le.s32.totalorder %v1052, 125
        %vm1451 = vcmp.le.s32.totalorder %v1055, 125
        %vm1452 = vcmp.le.s32.totalorder %v1058, 125
        %vm1453 = vcmp.le.s32.totalorder %v1061, 125
        %vm1454 = vcmp.le.s32.totalorder %v1064, 125
        %vm1455 = vcmp.le.s32.totalorder %v1067, 125
        %vm1456 = vcmp.le.s32.totalorder %v1070, 125
        %vm1457 = vcmp.le.s32.totalorder %v1073, 125
        %vm1458 = vcmp.le.s32.totalorder %v1076, 125
        %vm1459 = vcmp.le.s32.totalorder %v1079, 125
        %vm1460 = vcmp.le.s32.totalorder %v1082, 125
        %vm1461 = vcmp.le.s32.totalorder %v1085, 125
        %vm1462 = vcmp.le.s32.totalorder %v1088, 125
        %vm1463 = vcmp.le.s32.totalorder %v1091, 125
        %vm1464 = vcmp.le.s32.totalorder %v1094, 125
        %vm1465 = vcmp.le.s32.totalorder %v1097, 125
        %vm1466 = vcmp.le.s32.totalorder %v1100, 125
        %vm1467 = vcmp.le.s32.totalorder %v1103, 125
        %vm1468 = vcmp.le.s32.totalorder %v1106, 125
        %vm1469 = vcmp.le.s32.totalorder %v1109, 125
        %vm1470 = vcmp.le.s32.totalorder %v1112, 125
        %vm1471 = vcmp.le.s32.totalorder %v1115, 125
        %vm1472 = vcmp.le.s32.totalorder %v1118, 125
        %vm1473 = vcmp.le.s32.totalorder %v1121, 125
        %vm1474 = vcmp.le.s32.totalorder %v1124, 125
        %vm1475 = vcmp.le.s32.totalorder %v1127, 125
        %vm1476 = vcmp.le.s32.totalorder %v1130, 125
        %vm1477 = vcmp.le.s32.totalorder %v1133, 125
        %vm1478 = vcmp.le.s32.totalorder %v1136, 125
        %vm1479 = vcmp.le.s32.totalorder %v1139, 125
        %vm1480 = vcmp.le.s32.totalorder %v1142, 125
        %vm1481 = vcmp.le.s32.totalorder %v1145, 125
        %vm1482 = vcmp.le.s32.totalorder %v1148, 125
        %vm1483 = vcmp.le.s32.totalorder %v1151, 125
        %vm1484 = vcmp.le.s32.totalorder %v1154, 125
        %vm1485 = vcmp.le.s32.totalorder %v1157, 125
        %vm1486 = vcmp.le.s32.totalorder %v1160, 125
        %vm1487 = vcmp.le.s32.totalorder %v1163, 125
        %vm1488 = vcmp.le.s32.totalorder %v1166, 125
        %vm1489 = vcmp.le.s32.totalorder %v1169, 125
        %vm1490 = vcmp.le.s32.totalorder %v1172, 125
        %vm1491 = vcmp.le.s32.totalorder %v1175, 125
        %vm1492 = vcmp.le.s32.totalorder %v1178, 125
        %vm1493 = vcmp.le.s32.totalorder %v1181, 125
        %vm1494 = vcmp.le.s32.totalorder %v1184, 125
        %vm1495 = vcmp.le.s32.totalorder %v1187, 125
        %vm1496 = vcmp.le.s32.totalorder %v1190, 125
        %vm1497 = vcmp.le.s32.totalorder %v1193, 125
        %vm1498 = vcmp.le.s32.totalorder %v1196, 125
        %vm1499 = vcmp.le.s32.totalorder %v1199, 125
        %vm1500 = vcmp.le.s32.totalorder %v1202, 125
        %vm1501 = vcmp.le.s32.totalorder %v1205, 125
        %vm1502 = vcmp.le.s32.totalorder %v1208, 125
        %vm1503 = vcmp.le.s32.totalorder %v1211, 125
        %vm1504 = vcmp.le.s32.totalorder %v1214, 125
        %vm1505 = vcmp.le.s32.totalorder %v1217, 125
        %vm1506 = vcmp.le.s32.totalorder %v1220, 125
        %vm1507 = vcmp.le.s32.totalorder %v1223, 125
        %vm1508 = vcmp.le.s32.totalorder %v1226, 125
        %vm1509 = vcmp.le.s32.totalorder %v1229, 125
        %vm1510 = vcmp.le.s32.totalorder %v1232, 125
        %vm1511 = vcmp.le.s32.totalorder %v1235, 125
        %vm1512 = vcmp.le.s32.totalorder %v1238, 125
        %vm1513 = vcmp.le.s32.totalorder %v1241, 125
        %vm1514 = vcmp.le.s32.totalorder %v1244, 125
        %vm1515 = vcmp.le.s32.totalorder %v1247, 125
        %vm1516 = vcmp.le.s32.totalorder %v1250, 125
        %vm1517 = vcmp.le.s32.totalorder %v1253, 125
        %vm1518 = vcmp.le.s32.totalorder %v1256, 125
        %vm1519 = vcmp.le.s32.totalorder %v1259, 125
        %vm1520 = vcmp.le.s32.totalorder %v1262, 125
        %vm1521 = vcmp.le.s32.totalorder %v1265, 125
        %v1522 = vsel %vm1266, 1.0, 0.0
        %v1523 = vsel %vm1267, 1.0, 0.0
        %v1524 = vsel %vm1268, 1.0, 0.0
        %v1525 = vsel %vm1269, 1.0, 0.0
        %v1526 = vsel %vm1270, 1.0, 0.0
        %v1527 = vsel %vm1271, 1.0, 0.0
        %v1528 = vsel %vm1272, 1.0, 0.0
        %v1529 = vsel %vm1273, 1.0, 0.0
        %v1530 = vsel %vm1274, 1.0, 0.0
        %v1531 = vsel %vm1275, 1.0, 0.0
        %v1532 = vsel %vm1276, 1.0, 0.0
        %v1533 = vsel %vm1277, 1.0, 0.0
        %v1534 = vsel %vm1278, 1.0, 0.0
        %v1535 = vsel %vm1279, 1.0, 0.0
        %v1536 = vsel %vm1280, 1.0, 0.0
        %v1537 = vsel %vm1281, 1.0, 0.0
        %v1538 = vsel %vm1282, 1.0, 0.0
        %v1539 = vsel %vm1283, 1.0, 0.0
        %v1540 = vsel %vm1284, 1.0, 0.0
        %v1541 = vsel %vm1285, 1.0, 0.0
        %v1542 = vsel %vm1286, 1.0, 0.0
        %v1543 = vsel %vm1287, 1.0, 0.0
        %v1544 = vsel %vm1288, 1.0, 0.0
        %v1545 = vsel %vm1289, 1.0, 0.0
        %v1546 = vsel %vm1290, 1.0, 0.0
        %v1547 = vsel %vm1291, 1.0, 0.0
        %v1548 = vsel %vm1292, 1.0, 0.0
        %v1549 = vsel %vm1293, 1.0, 0.0
        %v1550 = vsel %vm1294, 1.0, 0.0
        %v1551 = vsel %vm1295, 1.0, 0.0
        %v1552 = vsel %vm1296, 1.0, 0.0
        %v1553 = vsel %vm1297, 1.0, 0.0
        %v1554 = vsel %vm1298, 1.0, 0.0
        %v1555 = vsel %vm1299, 1.0, 0.0
        %v1556 = vsel %vm1300, 1.0, 0.0
        %v1557 = vsel %vm1301, 1.0, 0.0
        %v1558 = vsel %vm1302, 1.0, 0.0
        %v1559 = vsel %vm1303, 1.0, 0.0
        %v1560 = vsel %vm1304, 1.0, 0.0
        %v1561 = vsel %vm1305, 1.0, 0.0
        %v1562 = vsel %vm1306, 1.0, 0.0
        %v1563 = vsel %vm1307, 1.0, 0.0
        %v1564 = vsel %vm1308, 1.0, 0.0
        %v1565 = vsel %vm1309, 1.0, 0.0
        %v1566 = vsel %vm1310, 1.0, 0.0
        %v1567 = vsel %vm1311, 1.0, 0.0
        %v1568 = vsel %vm1312, 1.0, 0.0
        %v1569 = vsel %vm1313, 1.0, 0.0
        %v1570 = vsel %vm1314, 1.0, 0.0
        %v1571 = vsel %vm1315, 1.0, 0.0
        %v1572 = vsel %vm1316, 1.0, 0.0
        %v1573 = vsel %vm1317, 1.0, 0.0
        %v1574 = vsel %vm1318, 1.0, 0.0
        %v1575 = vsel %vm1319, 1.0, 0.0
        %v1576 = vsel %vm1320, 1.0, 0.0
        %v1577 = vsel %vm1321, 1.0, 0.0
        %v1578 = vsel %vm1322, 1.0, 0.0
        %v1579 = vsel %vm1323, 1.0, 0.0
        %v1580 = vsel %vm1324, 1.0, 0.0
        %v1581 = vsel %vm1325, 1.0, 0.0
        %v1582 = vsel %vm1326, 1.0, 0.0
        %v1583 = vsel %vm1327, 1.0, 0.0
        %v1584 = vsel %vm1328, 1.0, 0.0
        %v1585 = vsel %vm1329, 1.0, 0.0
        %v1586 = vsel %vm1330, 1.0, 0.0
        %v1587 = vsel %vm1331, 1.0, 0.0
        %v1588 = vsel %vm1332, 1.0, 0.0
        %v1589 = vsel %vm1333, 1.0, 0.0
        %v1590 = vsel %vm1334, 1.0, 0.0
        %v1591 = vsel %vm1335, 1.0, 0.0
        %v1592 = vsel %vm1336, 1.0, 0.0
        %v1593 = vsel %vm1337, 1.0, 0.0
        %v1594 = vsel %vm1338, 1.0, 0.0
        %v1595 = vsel %vm1339, 1.0, 0.0
        %v1596 = vsel %vm1340, 1.0, 0.0
        %v1597 = vsel %vm1341, 1.0, 0.0
        %v1598 = vsel %vm1342, 1.0, 0.0
        %v1599 = vsel %vm1343, 1.0, 0.0
        %v1600 = vsel %vm1344, 1.0, 0.0
        %v1601 = vsel %vm1345, 1.0, 0.0
        %v1602 = vsel %vm1346, 1.0, 0.0
        %v1603 = vsel %vm1347, 1.0, 0.0
        %v1604 = vsel %vm1348, 1.0, 0.0
        %v1605 = vsel %vm1349, 1.0, 0.0
        %v1606 = vsel %vm1350, 1.0, 0.0
        %v1607 = vsel %vm1351, 1.0, 0.0
        %v1608 = vsel %vm1352, 1.0, 0.0
        %v1609 = vsel %vm1353, 1.0, 0.0
        %v1610 = vsel %vm1354, 1.0, 0.0
        %v1611 = vsel %vm1355, 1.0, 0.0
        %v1612 = vsel %vm1356, 1.0, 0.0
        %v1613 = vsel %vm1357, 1.0, 0.0
        %v1614 = vsel %vm1358, 1.0, 0.0
        %v1615 = vsel %vm1359, 1.0, 0.0
        %v1616 = vsel %vm1360, 1.0, 0.0
        %v1617 = vsel %vm1361, 1.0, 0.0
        %v1618 = vsel %vm1362, 1.0, 0.0
        %v1619 = vsel %vm1363, 1.0, 0.0
        %v1620 = vsel %vm1364, 1.0, 0.0
        %v1621 = vsel %vm1365, 1.0, 0.0
        %v1622 = vsel %vm1366, 1.0, 0.0
        %v1623 = vsel %vm1367, 1.0, 0.0
        %v1624 = vsel %vm1368, 1.0, 0.0
        %v1625 = vsel %vm1369, 1.0, 0.0
        %v1626 = vsel %vm1370, 1.0, 0.0
        %v1627 = vsel %vm1371, 1.0, 0.0
        %v1628 = vsel %vm1372, 1.0, 0.0
        %v1629 = vsel %vm1373, 1.0, 0.0
        %v1630 = vsel %vm1374, 1.0, 0.0
        %v1631 = vsel %vm1375, 1.0, 0.0
        %v1632 = vsel %vm1376, 1.0, 0.0
        %v1633 = vsel %vm1377, 1.0, 0.0
        %v1634 = vsel %vm1378, 1.0, 0.0
        %v1635 = vsel %vm1379, 1.0, 0.0
        %v1636 = vsel %vm1380, 1.0, 0.0
        %v1637 = vsel %vm1381, 1.0, 0.0
        %v1638 = vsel %vm1382, 1.0, 0.0
        %v1639 = vsel %vm1383, 1.0, 0.0
        %v1640 = vsel %vm1384, 1.0, 0.0
        %v1641 = vsel %vm1385, 1.0, 0.0
        %v1642 = vsel %vm1386, 1.0, 0.0
        %v1643 = vsel %vm1387, 1.0, 0.0
        %v1644 = vsel %vm1388, 1.0, 0.0
        %v1645 = vsel %vm1389, 1.0, 0.0
        %v1646 = vsel %vm1390, 1.0, 0.0
        %v1647 = vsel %vm1391, 1.0, 0.0
        %v1648 = vsel %vm1392, 1.0, 0.0
        %v1649 = vsel %vm1393, 1.0, 0.0
        %v1650 = vsel %vm1394, 1.0, 0.0
        %v1651 = vsel %vm1395, 1.0, 0.0
        %v1652 = vsel %vm1396, 1.0, 0.0
        %v1653 = vsel %vm1397, 1.0, 0.0
        %v1654 = vsel %vm1398, 1.0, 0.0
        %v1655 = vsel %vm1399, 1.0, 0.0
        %v1656 = vsel %vm1400, 1.0, 0.0
        %v1657 = vsel %vm1401, 1.0, 0.0
        %v1658 = vsel %vm1402, 1.0, 0.0
        %v1659 = vsel %vm1403, 1.0, 0.0
        %v1660 = vsel %vm1404, 1.0, 0.0
        %v1661 = vsel %vm1405, 1.0, 0.0
        %v1662 = vsel %vm1406, 1.0, 0.0
        %v1663 = vsel %vm1407, 1.0, 0.0
        %v1664 = vsel %vm1408, 1.0, 0.0
        %v1665 = vsel %vm1409, 1.0, 0.0
        %v1666 = vsel %vm1410, 1.0, 0.0
        %v1667 = vsel %vm1411, 1.0, 0.0
        %v1668 = vsel %vm1412, 1.0, 0.0
        %v1669 = vsel %vm1413, 1.0, 0.0
        %v1670 = vsel %vm1414, 1.0, 0.0
        %v1671 = vsel %vm1415, 1.0, 0.0
        %v1672 = vsel %vm1416, 1.0, 0.0
        %v1673 = vsel %vm1417, 1.0, 0.0
        %v1674 = vsel %vm1418, 1.0, 0.0
        %v1675 = vsel %vm1419, 1.0, 0.0
        %v1676 = vsel %vm1420, 1.0, 0.0
        %v1677 = vsel %vm1421, 1.0, 0.0
        %v1678 = vsel %vm1422, 1.0, 0.0
        %v1679 = vsel %vm1423, 1.0, 0.0
        %v1680 = vsel %vm1424, 1.0, 0.0
        %v1681 = vsel %vm1425, 1.0, 0.0
        %v1682 = vsel %vm1426, 1.0, 0.0
        %v1683 = vsel %vm1427, 1.0, 0.0
        %v1684 = vsel %vm1428, 1.0, 0.0
        %v1685 = vsel %vm1429, 1.0, 0.0
        %v1686 = vsel %vm1430, 1.0, 0.0
        %v1687 = vsel %vm1431, 1.0, 0.0
        %v1688 = vsel %vm1432, 1.0, 0.0
        %v1689 = vsel %vm1433, 1.0, 0.0
        %v1690 = vsel %vm1434, 1.0, 0.0
        %v1691 = vsel %vm1435, 1.0, 0.0
        %v1692 = vsel %vm1436, 1.0, 0.0
        %v1693 = vsel %vm1437, 1.0, 0.0
        %v1694 = vsel %vm1438, 1.0, 0.0
        %v1695 = vsel %vm1439, 1.0, 0.0
        %v1696 = vsel %vm1440, 1.0, 0.0
        %v1697 = vsel %vm1441, 1.0, 0.0
        %v1698 = vsel %vm1442, 1.0, 0.0
        %v1699 = vsel %vm1443, 1.0, 0.0
        %v1700 = vsel %vm1444, 1.0, 0.0
        %v1701 = vsel %vm1445, 1.0, 0.0
        %v1702 = vsel %vm1446, 1.0, 0.0
        %v1703 = vsel %vm1447, 1.0, 0.0
        %v1704 = vsel %vm1448, 1.0, 0.0
        %v1705 = vsel %vm1449, 1.0, 0.0
        %v1706 = vsel %vm1450, 1.0, 0.0
        %v1707 = vsel %vm1451, 1.0, 0.0
        %v1708 = vsel %vm1452, 1.0, 0.0
        %v1709 = vsel %vm1453, 1.0, 0.0
        %v1710 = vsel %vm1454, 1.0, 0.0
        %v1711 = vsel %vm1455, 1.0, 0.0
        %v1712 = vsel %vm1456, 1.0, 0.0
        %v1713 = vsel %vm1457, 1.0, 0.0
        %v1714 = vsel %vm1458, 1.0, 0.0
        %v1715 = vsel %vm1459, 1.0, 0.0
        %v1716 = vsel %vm1460, 1.0, 0.0
        %v1717 = vsel %vm1461, 1.0, 0.0
        %v1718 = vsel %vm1462, 1.0, 0.0
        %v1719 = vsel %vm1463, 1.0, 0.0
        %v1720 = vsel %vm1464, 1.0, 0.0
        %v1721 = vsel %vm1465, 1.0, 0.0
        %v1722 = vsel %vm1466, 1.0, 0.0
        %v1723 = vsel %vm1467, 1.0, 0.0
        %v1724 = vsel %vm1468, 1.0, 0.0
        %v1725 = vsel %vm1469, 1.0, 0.0
        %v1726 = vsel %vm1470, 1.0, 0.0
        %v1727 = vsel %vm1471, 1.0, 0.0
        %v1728 = vsel %vm1472, 1.0, 0.0
        %v1729 = vsel %vm1473, 1.0, 0.0
        %v1730 = vsel %vm1474, 1.0, 0.0
        %v1731 = vsel %vm1475, 1.0, 0.0
        %v1732 = vsel %vm1476, 1.0, 0.0
        %v1733 = vsel %vm1477, 1.0, 0.0
        %v1734 = vsel %vm1478, 1.0, 0.0
        %v1735 = vsel %vm1479, 1.0, 0.0
        %v1736 = vsel %vm1480, 1.0, 0.0
        %v1737 = vsel %vm1481, 1.0, 0.0
        %v1738 = vsel %vm1482, 1.0, 0.0
        %v1739 = vsel %vm1483, 1.0, 0.0
        %v1740 = vsel %vm1484, 1.0, 0.0
        %v1741 = vsel %vm1485, 1.0, 0.0
        %v1742 = vsel %vm1486, 1.0, 0.0
        %v1743 = vsel %vm1487, 1.0, 0.0
        %v1744 = vsel %vm1488, 1.0, 0.0
        %v1745 = vsel %vm1489, 1.0, 0.0
        %v1746 = vsel %vm1490, 1.0, 0.0
        %v1747 = vsel %vm1491, 1.0, 0.0
        %v1748 = vsel %vm1492, 1.0, 0.0
        %v1749 = vsel %vm1493, 1.0, 0.0
        %v1750 = vsel %vm1494, 1.0, 0.0
        %v1751 = vsel %vm1495, 1.0, 0.0
        %v1752 = vsel %vm1496, 1.0, 0.0
        %v1753 = vsel %vm1497, 1.0, 0.0
        %v1754 = vsel %vm1498, 1.0, 0.0
        %v1755 = vsel %vm1499, 1.0, 0.0
        %v1756 = vsel %vm1500, 1.0, 0.0
        %v1757 = vsel %vm1501, 1.0, 0.0
        %v1758 = vsel %vm1502, 1.0, 0.0
        %v1759 = vsel %vm1503, 1.0, 0.0
        %v1760 = vsel %vm1504, 1.0, 0.0
        %v1761 = vsel %vm1505, 1.0, 0.0
        %v1762 = vsel %vm1506, 1.0, 0.0
        %v1763 = vsel %vm1507, 1.0, 0.0
        %v1764 = vsel %vm1508, 1.0, 0.0
        %v1765 = vsel %vm1509, 1.0, 0.0
        %v1766 = vsel %vm1510, 1.0, 0.0
        %v1767 = vsel %vm1511, 1.0, 0.0
        %v1768 = vsel %vm1512, 1.0, 0.0
        %v1769 = vsel %vm1513, 1.0, 0.0
        %v1770 = vsel %vm1514, 1.0, 0.0
        %v1771 = vsel %vm1515, 1.0, 0.0
        %v1772 = vsel %vm1516, 1.0, 0.0
        %v1773 = vsel %vm1517, 1.0, 0.0
        %v1774 = vsel %vm1518, 1.0, 0.0
        %v1775 = vsel %vm1519, 1.0, 0.0
        %v1776 = vsel %vm1520, 1.0, 0.0
        %v1777 = vsel %vm1521, 1.0, 0.0
        %v1778 = vpack.c.bf16 %v1526, %v1522
        %v1779 = vpack.c.bf16 %v1527, %v1523
        %v1780 = vpack.c.bf16 %v1528, %v1524
        %v1781 = vpack.c.bf16 %v1529, %v1525
        %v1782 = vpack.c.bf16 %v1534, %v1530
        %v1783 = vpack.c.bf16 %v1535, %v1531
        %v1784 = vpack.c.bf16 %v1536, %v1532
        %v1785 = vpack.c.bf16 %v1537, %v1533
        %v1786 = vpack.c.bf16 %v1542, %v1538
        %v1787 = vpack.c.bf16 %v1543, %v1539
        %v1788 = vpack.c.bf16 %v1544, %v1540
        %v1789 = vpack.c.bf16 %v1545, %v1541
        %v1790 = vpack.c.bf16 %v1550, %v1546
        %v1791 = vpack.c.bf16 %v1551, %v1547
        %v1792 = vpack.c.bf16 %v1552, %v1548
        %v1793 = vpack.c.bf16 %v1553, %v1549
        %v1794 = vpack.c.bf16 %v1558, %v1554
        %v1795 = vpack.c.bf16 %v1559, %v1555
        %v1796 = vpack.c.bf16 %v1560, %v1556
        %v1797 = vpack.c.bf16 %v1561, %v1557
        %v1798 = vpack.c.bf16 %v1566, %v1562
        %v1799 = vpack.c.bf16 %v1567, %v1563
        %v1800 = vpack.c.bf16 %v1568, %v1564
        %v1801 = vpack.c.bf16 %v1569, %v1565
        %v1802 = vpack.c.bf16 %v1574, %v1570
        %v1803 = vpack.c.bf16 %v1575, %v1571
        %v1804 = vpack.c.bf16 %v1576, %v1572
        %v1805 = vpack.c.bf16 %v1577, %v1573
        %v1806 = vpack.c.bf16 %v1582, %v1578
        %v1807 = vpack.c.bf16 %v1583, %v1579
        %v1808 = vpack.c.bf16 %v1584, %v1580
        %v1809 = vpack.c.bf16 %v1585, %v1581
        %v1810 = vpack.c.bf16 %v1590, %v1586
        %v1811 = vpack.c.bf16 %v1591, %v1587
        %v1812 = vpack.c.bf16 %v1592, %v1588
        %v1813 = vpack.c.bf16 %v1593, %v1589
        %v1814 = vpack.c.bf16 %v1598, %v1594
        %v1815 = vpack.c.bf16 %v1599, %v1595
        %v1816 = vpack.c.bf16 %v1600, %v1596
        %v1817 = vpack.c.bf16 %v1601, %v1597
        %v1818 = vpack.c.bf16 %v1606, %v1602
        %v1819 = vpack.c.bf16 %v1607, %v1603
        %v1820 = vpack.c.bf16 %v1608, %v1604
        %v1821 = vpack.c.bf16 %v1609, %v1605
        %v1822 = vpack.c.bf16 %v1614, %v1610
        %v1823 = vpack.c.bf16 %v1615, %v1611
        %v1824 = vpack.c.bf16 %v1616, %v1612
        %v1825 = vpack.c.bf16 %v1617, %v1613
        %v1826 = vpack.c.bf16 %v1622, %v1618
        %v1827 = vpack.c.bf16 %v1623, %v1619
        %v1828 = vpack.c.bf16 %v1624, %v1620
        %v1829 = vpack.c.bf16 %v1625, %v1621
        %v1830 = vpack.c.bf16 %v1630, %v1626
        %v1831 = vpack.c.bf16 %v1631, %v1627
        %v1832 = vpack.c.bf16 %v1632, %v1628
        %v1833 = vpack.c.bf16 %v1633, %v1629
        %v1834 = vpack.c.bf16 %v1638, %v1634
        %v1835 = vpack.c.bf16 %v1639, %v1635
        %v1836 = vpack.c.bf16 %v1640, %v1636
        %v1837 = vpack.c.bf16 %v1641, %v1637
        %v1838 = vpack.c.bf16 %v1646, %v1642
        %v1839 = vpack.c.bf16 %v1647, %v1643
        %v1840 = vpack.c.bf16 %v1648, %v1644
        %v1841 = vpack.c.bf16 %v1649, %v1645
        %v1842 = vpack.c.bf16 %v1654, %v1650
        %v1843 = vpack.c.bf16 %v1655, %v1651
        %v1844 = vpack.c.bf16 %v1656, %v1652
        %v1845 = vpack.c.bf16 %v1657, %v1653
        %v1846 = vpack.c.bf16 %v1662, %v1658
        %v1847 = vpack.c.bf16 %v1663, %v1659
        %v1848 = vpack.c.bf16 %v1664, %v1660
        %v1849 = vpack.c.bf16 %v1665, %v1661
        %v1850 = vpack.c.bf16 %v1670, %v1666
        %v1851 = vpack.c.bf16 %v1671, %v1667
        %v1852 = vpack.c.bf16 %v1672, %v1668
        %v1853 = vpack.c.bf16 %v1673, %v1669
        %v1854 = vpack.c.bf16 %v1678, %v1674
        %v1855 = vpack.c.bf16 %v1679, %v1675
        %v1856 = vpack.c.bf16 %v1680, %v1676
        %v1857 = vpack.c.bf16 %v1681, %v1677
        %v1858 = vpack.c.bf16 %v1686, %v1682
        %v1859 = vpack.c.bf16 %v1687, %v1683
        %v1860 = vpack.c.bf16 %v1688, %v1684
        %v1861 = vpack.c.bf16 %v1689, %v1685
        %v1862 = vpack.c.bf16 %v1694, %v1690
        %v1863 = vpack.c.bf16 %v1695, %v1691
        %v1864 = vpack.c.bf16 %v1696, %v1692
        %v1865 = vpack.c.bf16 %v1697, %v1693
        %v1866 = vpack.c.bf16 %v1702, %v1698
        %v1867 = vpack.c.bf16 %v1703, %v1699
        %v1868 = vpack.c.bf16 %v1704, %v1700
        %v1869 = vpack.c.bf16 %v1705, %v1701
        %v1870 = vpack.c.bf16 %v1710, %v1706
        %v1871 = vpack.c.bf16 %v1711, %v1707
        %v1872 = vpack.c.bf16 %v1712, %v1708
        %v1873 = vpack.c.bf16 %v1713, %v1709
        %v1874 = vpack.c.bf16 %v1718, %v1714
        %v1875 = vpack.c.bf16 %v1719, %v1715
        %v1876 = vpack.c.bf16 %v1720, %v1716
        %v1877 = vpack.c.bf16 %v1721, %v1717
        %v1878 = vpack.c.bf16 %v1726, %v1722
        %v1879 = vpack.c.bf16 %v1727, %v1723
        %v1880 = vpack.c.bf16 %v1728, %v1724
        %v1881 = vpack.c.bf16 %v1729, %v1725
        %v1882 = vpack.c.bf16 %v1734, %v1730
        %v1883 = vpack.c.bf16 %v1735, %v1731
        %v1884 = vpack.c.bf16 %v1736, %v1732
        %v1885 = vpack.c.bf16 %v1737, %v1733
        %v1886 = vpack.c.bf16 %v1742, %v1738
        %v1887 = vpack.c.bf16 %v1743, %v1739
        %v1888 = vpack.c.bf16 %v1744, %v1740
        %v1889 = vpack.c.bf16 %v1745, %v1741
        %v1890 = vpack.c.bf16 %v1750, %v1746
        %v1891 = vpack.c.bf16 %v1751, %v1747
        %v1892 = vpack.c.bf16 %v1752, %v1748
        %v1893 = vpack.c.bf16 %v1753, %v1749
        %v1894 = vpack.c.bf16 %v1758, %v1754
        %v1895 = vpack.c.bf16 %v1759, %v1755
        %v1896 = vpack.c.bf16 %v1760, %v1756
        %v1897 = vpack.c.bf16 %v1761, %v1757
        %v1898 = vpack.c.bf16 %v1766, %v1762
        %v1899 = vpack.c.bf16 %v1767, %v1763
        %v1900 = vpack.c.bf16 %v1768, %v1764
        %v1901 = vpack.c.bf16 %v1769, %v1765
        %v1902 = vpack.c.bf16 %v1774, %v1770
        %v1903 = vpack.c.bf16 %v1775, %v1771
        %v1904 = vpack.c.bf16 %v1776, %v1772
        %v1905 = vpack.c.bf16 %v1777, %v1773
        %vm1906 = vcmp.le.s32.totalorder %v500, 250
        %vm1907 = vcmp.le.s32.totalorder %v503, 250
        %vm1908 = vcmp.le.s32.totalorder %v506, 250
        %vm1909 = vcmp.le.s32.totalorder %v509, 250
        %vm1910 = vcmp.le.s32.totalorder %v512, 250
        %vm1911 = vcmp.le.s32.totalorder %v515, 250
        %vm1912 = vcmp.le.s32.totalorder %v518, 250
        %vm1913 = vcmp.le.s32.totalorder %v521, 250
        %vm1914 = vcmp.le.s32.totalorder %v524, 250
        %vm1915 = vcmp.le.s32.totalorder %v527, 250
        %vm1916 = vcmp.le.s32.totalorder %v530, 250
        %vm1917 = vcmp.le.s32.totalorder %v533, 250
        %vm1918 = vcmp.le.s32.totalorder %v536, 250
        %vm1919 = vcmp.le.s32.totalorder %v539, 250
        %vm1920 = vcmp.le.s32.totalorder %v542, 250
        %vm1921 = vcmp.le.s32.totalorder %v545, 250
        %vm1922 = vcmp.le.s32.totalorder %v548, 250
        %vm1923 = vcmp.le.s32.totalorder %v551, 250
        %vm1924 = vcmp.le.s32.totalorder %v554, 250
        %vm1925 = vcmp.le.s32.totalorder %v557, 250
        %vm1926 = vcmp.le.s32.totalorder %v560, 250
        %vm1927 = vcmp.le.s32.totalorder %v563, 250
        %vm1928 = vcmp.le.s32.totalorder %v566, 250
        %vm1929 = vcmp.le.s32.totalorder %v569, 250
        %vm1930 = vcmp.le.s32.totalorder %v572, 250
        %vm1931 = vcmp.le.s32.totalorder %v575, 250
        %vm1932 = vcmp.le.s32.totalorder %v578, 250
        %vm1933 = vcmp.le.s32.totalorder %v581, 250
        %vm1934 = vcmp.le.s32.totalorder %v584, 250
        %vm1935 = vcmp.le.s32.totalorder %v587, 250
        %vm1936 = vcmp.le.s32.totalorder %v590, 250
        %vm1937 = vcmp.le.s32.totalorder %v593, 250
        %vm1938 = vcmp.le.s32.totalorder %v596, 250
        %vm1939 = vcmp.le.s32.totalorder %v599, 250
        %vm1940 = vcmp.le.s32.totalorder %v602, 250
        %vm1941 = vcmp.le.s32.totalorder %v605, 250
        %vm1942 = vcmp.le.s32.totalorder %v608, 250
        %vm1943 = vcmp.le.s32.totalorder %v611, 250
        %vm1944 = vcmp.le.s32.totalorder %v614, 250
        %vm1945 = vcmp.le.s32.totalorder %v617, 250
        %vm1946 = vcmp.le.s32.totalorder %v620, 250
        %vm1947 = vcmp.le.s32.totalorder %v623, 250
        %vm1948 = vcmp.le.s32.totalorder %v626, 250
        %vm1949 = vcmp.le.s32.totalorder %v629, 250
        %vm1950 = vcmp.le.s32.totalorder %v632, 250
        %vm1951 = vcmp.le.s32.totalorder %v635, 250
        %vm1952 = vcmp.le.s32.totalorder %v638, 250
        %vm1953 = vcmp.le.s32.totalorder %v641, 250
        %vm1954 = vcmp.le.s32.totalorder %v644, 250
        %vm1955 = vcmp.le.s32.totalorder %v647, 250
        %vm1956 = vcmp.le.s32.totalorder %v650, 250
        %vm1957 = vcmp.le.s32.totalorder %v653, 250
        %vm1958 = vcmp.le.s32.totalorder %v656, 250
        %vm1959 = vcmp.le.s32.totalorder %v659, 250
        %vm1960 = vcmp.le.s32.totalorder %v662, 250
        %vm1961 = vcmp.le.s32.totalorder %v665, 250
        %vm1962 = vcmp.le.s32.totalorder %v668, 250
        %vm1963 = vcmp.le.s32.totalorder %v671, 250
        %vm1964 = vcmp.le.s32.totalorder %v674, 250
        %vm1965 = vcmp.le.s32.totalorder %v677, 250
        %vm1966 = vcmp.le.s32.totalorder %v680, 250
        %vm1967 = vcmp.le.s32.totalorder %v683, 250
        %vm1968 = vcmp.le.s32.totalorder %v686, 250
        %vm1969 = vcmp.le.s32.totalorder %v689, 250
        %vm1970 = vcmp.le.s32.totalorder %v692, 250
        %vm1971 = vcmp.le.s32.totalorder %v695, 250
        %vm1972 = vcmp.le.s32.totalorder %v698, 250
        %vm1973 = vcmp.le.s32.totalorder %v701, 250
        %vm1974 = vcmp.le.s32.totalorder %v704, 250
        %vm1975 = vcmp.le.s32.totalorder %v707, 250
        %vm1976 = vcmp.le.s32.totalorder %v710, 250
        %vm1977 = vcmp.le.s32.totalorder %v713, 250
        %vm1978 = vcmp.le.s32.totalorder %v716, 250
        %vm1979 = vcmp.le.s32.totalorder %v719, 250
        %vm1980 = vcmp.le.s32.totalorder %v722, 250
        %vm1981 = vcmp.le.s32.totalorder %v725, 250
        %vm1982 = vcmp.le.s32.totalorder %v728, 250
        %vm1983 = vcmp.le.s32.totalorder %v731, 250
        %vm1984 = vcmp.le.s32.totalorder %v734, 250
        %vm1985 = vcmp.le.s32.totalorder %v737, 250
        %vm1986 = vcmp.le.s32.totalorder %v740, 250
        %vm1987 = vcmp.le.s32.totalorder %v743, 250
        %vm1988 = vcmp.le.s32.totalorder %v746, 250
        %vm1989 = vcmp.le.s32.totalorder %v749, 250
        %vm1990 = vcmp.le.s32.totalorder %v752, 250
        %vm1991 = vcmp.le.s32.totalorder %v755, 250
        %vm1992 = vcmp.le.s32.totalorder %v758, 250
        %vm1993 = vcmp.le.s32.totalorder %v761, 250
        %vm1994 = vcmp.le.s32.totalorder %v764, 250
        %vm1995 = vcmp.le.s32.totalorder %v767, 250
        %vm1996 = vcmp.le.s32.totalorder %v770, 250
        %vm1997 = vcmp.le.s32.totalorder %v773, 250
        %vm1998 = vcmp.le.s32.totalorder %v776, 250
        %vm1999 = vcmp.le.s32.totalorder %v779, 250
        %vm2000 = vcmp.le.s32.totalorder %v782, 250
        %vm2001 = vcmp.le.s32.totalorder %v785, 250
        %vm2002 = vcmp.le.s32.totalorder %v788, 250
        %vm2003 = vcmp.le.s32.totalorder %v791, 250
        %vm2004 = vcmp.le.s32.totalorder %v794, 250
        %vm2005 = vcmp.le.s32.totalorder %v797, 250
        %vm2006 = vcmp.le.s32.totalorder %v800, 250
        %vm2007 = vcmp.le.s32.totalorder %v803, 250
        %vm2008 = vcmp.le.s32.totalorder %v806, 250
        %vm2009 = vcmp.le.s32.totalorder %v809, 250
        %vm2010 = vcmp.le.s32.totalorder %v812, 250
        %vm2011 = vcmp.le.s32.totalorder %v815, 250
        %vm2012 = vcmp.le.s32.totalorder %v818, 250
        %vm2013 = vcmp.le.s32.totalorder %v821, 250
        %vm2014 = vcmp.le.s32.totalorder %v824, 250
        %vm2015 = vcmp.le.s32.totalorder %v827, 250
        %vm2016 = vcmp.le.s32.totalorder %v830, 250
        %vm2017 = vcmp.le.s32.totalorder %v833, 250
        %vm2018 = vcmp.le.s32.totalorder %v836, 250
        %vm2019 = vcmp.le.s32.totalorder %v839, 250
        %vm2020 = vcmp.le.s32.totalorder %v842, 250
        %vm2021 = vcmp.le.s32.totalorder %v845, 250
        %vm2022 = vcmp.le.s32.totalorder %v848, 250
        %vm2023 = vcmp.le.s32.totalorder %v851, 250
        %vm2024 = vcmp.le.s32.totalorder %v854, 250
        %vm2025 = vcmp.le.s32.totalorder %v857, 250
        %vm2026 = vcmp.le.s32.totalorder %v860, 250
        %vm2027 = vcmp.le.s32.totalorder %v863, 250
        %vm2028 = vcmp.le.s32.totalorder %v866, 250
        %vm2029 = vcmp.le.s32.totalorder %v869, 250
        %vm2030 = vcmp.le.s32.totalorder %v872, 250
        %vm2031 = vcmp.le.s32.totalorder %v875, 250
        %vm2032 = vcmp.le.s32.totalorder %v878, 250
        %vm2033 = vcmp.le.s32.totalorder %v881, 250
        %vm2034 = vcmp.le.s32.totalorder %v884, 250
        %vm2035 = vcmp.le.s32.totalorder %v887, 250
        %vm2036 = vcmp.le.s32.totalorder %v890, 250
        %vm2037 = vcmp.le.s32.totalorder %v893, 250
        %vm2038 = vcmp.le.s32.totalorder %v896, 250
        %vm2039 = vcmp.le.s32.totalorder %v899, 250
        %vm2040 = vcmp.le.s32.totalorder %v902, 250
        %vm2041 = vcmp.le.s32.totalorder %v905, 250
        %vm2042 = vcmp.le.s32.totalorder %v908, 250
        %vm2043 = vcmp.le.s32.totalorder %v911, 250
        %vm2044 = vcmp.le.s32.totalorder %v914, 250
        %vm2045 = vcmp.le.s32.totalorder %v917, 250
        %vm2046 = vcmp.le.s32.totalorder %v920, 250
        %vm2047 = vcmp.le.s32.totalorder %v923, 250
        %vm2048 = vcmp.le.s32.totalorder %v926, 250
        %vm2049 = vcmp.le.s32.totalorder %v929, 250
        %vm2050 = vcmp.le.s32.totalorder %v932, 250
        %vm2051 = vcmp.le.s32.totalorder %v935, 250
        %vm2052 = vcmp.le.s32.totalorder %v938, 250
        %vm2053 = vcmp.le.s32.totalorder %v941, 250
        %vm2054 = vcmp.le.s32.totalorder %v944, 250
        %vm2055 = vcmp.le.s32.totalorder %v947, 250
        %vm2056 = vcmp.le.s32.totalorder %v950, 250
        %vm2057 = vcmp.le.s32.totalorder %v953, 250
        %vm2058 = vcmp.le.s32.totalorder %v956, 250
        %vm2059 = vcmp.le.s32.totalorder %v959, 250
        %vm2060 = vcmp.le.s32.totalorder %v962, 250
        %vm2061 = vcmp.le.s32.totalorder %v965, 250
        %vm2062 = vcmp.le.s32.totalorder %v968, 250
        %vm2063 = vcmp.le.s32.totalorder %v971, 250
        %vm2064 = vcmp.le.s32.totalorder %v974, 250
        %vm2065 = vcmp.le.s32.totalorder %v977, 250
        %vm2066 = vcmp.le.s32.totalorder %v980, 250
        %vm2067 = vcmp.le.s32.totalorder %v983, 250
        %vm2068 = vcmp.le.s32.totalorder %v986, 250
        %vm2069 = vcmp.le.s32.totalorder %v989, 250
        %vm2070 = vcmp.le.s32.totalorder %v992, 250
        %vm2071 = vcmp.le.s32.totalorder %v995, 250
        %vm2072 = vcmp.le.s32.totalorder %v998, 250
        %vm2073 = vcmp.le.s32.totalorder %v1001, 250
        %vm2074 = vcmp.le.s32.totalorder %v1004, 250
        %vm2075 = vcmp.le.s32.totalorder %v1007, 250
        %vm2076 = vcmp.le.s32.totalorder %v1010, 250
        %vm2077 = vcmp.le.s32.totalorder %v1013, 250
        %vm2078 = vcmp.le.s32.totalorder %v1016, 250
        %vm2079 = vcmp.le.s32.totalorder %v1019, 250
        %vm2080 = vcmp.le.s32.totalorder %v1022, 250
        %vm2081 = vcmp.le.s32.totalorder %v1025, 250
        %vm2082 = vcmp.le.s32.totalorder %v1028, 250
        %vm2083 = vcmp.le.s32.totalorder %v1031, 250
        %vm2084 = vcmp.le.s32.totalorder %v1034, 250
        %vm2085 = vcmp.le.s32.totalorder %v1037, 250
        %vm2086 = vcmp.le.s32.totalorder %v1040, 250
        %vm2087 = vcmp.le.s32.totalorder %v1043, 250
        %vm2088 = vcmp.le.s32.totalorder %v1046, 250
        %vm2089 = vcmp.le.s32.totalorder %v1049, 250
        %vm2090 = vcmp.le.s32.totalorder %v1052, 250
        %vm2091 = vcmp.le.s32.totalorder %v1055, 250
        %vm2092 = vcmp.le.s32.totalorder %v1058, 250
        %vm2093 = vcmp.le.s32.totalorder %v1061, 250
        %vm2094 = vcmp.le.s32.totalorder %v1064, 250
        %vm2095 = vcmp.le.s32.totalorder %v1067, 250
        %vm2096 = vcmp.le.s32.totalorder %v1070, 250
        %vm2097 = vcmp.le.s32.totalorder %v1073, 250
        %vm2098 = vcmp.le.s32.totalorder %v1076, 250
        %vm2099 = vcmp.le.s32.totalorder %v1079, 250
        %vm2100 = vcmp.le.s32.totalorder %v1082, 250
        %vm2101 = vcmp.le.s32.totalorder %v1085, 250
        %vm2102 = vcmp.le.s32.totalorder %v1088, 250
        %vm2103 = vcmp.le.s32.totalorder %v1091, 250
        %vm2104 = vcmp.le.s32.totalorder %v1094, 250
        %vm2105 = vcmp.le.s32.totalorder %v1097, 250
        %vm2106 = vcmp.le.s32.totalorder %v1100, 250
        %vm2107 = vcmp.le.s32.totalorder %v1103, 250
        %vm2108 = vcmp.le.s32.totalorder %v1106, 250
        %vm2109 = vcmp.le.s32.totalorder %v1109, 250
        %vm2110 = vcmp.le.s32.totalorder %v1112, 250
        %vm2111 = vcmp.le.s32.totalorder %v1115, 250
        %vm2112 = vcmp.le.s32.totalorder %v1118, 250
        %vm2113 = vcmp.le.s32.totalorder %v1121, 250
        %vm2114 = vcmp.le.s32.totalorder %v1124, 250
        %vm2115 = vcmp.le.s32.totalorder %v1127, 250
        %vm2116 = vcmp.le.s32.totalorder %v1130, 250
        %vm2117 = vcmp.le.s32.totalorder %v1133, 250
        %vm2118 = vcmp.le.s32.totalorder %v1136, 250
        %vm2119 = vcmp.le.s32.totalorder %v1139, 250
        %vm2120 = vcmp.le.s32.totalorder %v1142, 250
        %vm2121 = vcmp.le.s32.totalorder %v1145, 250
        %vm2122 = vcmp.le.s32.totalorder %v1148, 250
        %vm2123 = vcmp.le.s32.totalorder %v1151, 250
        %vm2124 = vcmp.le.s32.totalorder %v1154, 250
        %vm2125 = vcmp.le.s32.totalorder %v1157, 250
        %vm2126 = vcmp.le.s32.totalorder %v1160, 250
        %vm2127 = vcmp.le.s32.totalorder %v1163, 250
        %vm2128 = vcmp.le.s32.totalorder %v1166, 250
        %vm2129 = vcmp.le.s32.totalorder %v1169, 250
        %vm2130 = vcmp.le.s32.totalorder %v1172, 250
        %vm2131 = vcmp.le.s32.totalorder %v1175, 250
        %vm2132 = vcmp.le.s32.totalorder %v1178, 250
        %vm2133 = vcmp.le.s32.totalorder %v1181, 250
        %vm2134 = vcmp.le.s32.totalorder %v1184, 250
        %vm2135 = vcmp.le.s32.totalorder %v1187, 250
        %vm2136 = vcmp.le.s32.totalorder %v1190, 250
        %vm2137 = vcmp.le.s32.totalorder %v1193, 250
        %vm2138 = vcmp.le.s32.totalorder %v1196, 250
        %vm2139 = vcmp.le.s32.totalorder %v1199, 250
        %vm2140 = vcmp.le.s32.totalorder %v1202, 250
        %vm2141 = vcmp.le.s32.totalorder %v1205, 250
        %vm2142 = vcmp.le.s32.totalorder %v1208, 250
        %vm2143 = vcmp.le.s32.totalorder %v1211, 250
        %vm2144 = vcmp.le.s32.totalorder %v1214, 250
        %vm2145 = vcmp.le.s32.totalorder %v1217, 250
        %vm2146 = vcmp.le.s32.totalorder %v1220, 250
        %vm2147 = vcmp.le.s32.totalorder %v1223, 250
        %vm2148 = vcmp.le.s32.totalorder %v1226, 250
        %vm2149 = vcmp.le.s32.totalorder %v1229, 250
        %vm2150 = vcmp.le.s32.totalorder %v1232, 250
        %vm2151 = vcmp.le.s32.totalorder %v1235, 250
        %vm2152 = vcmp.le.s32.totalorder %v1238, 250
        %vm2153 = vcmp.le.s32.totalorder %v1241, 250
        %vm2154 = vcmp.le.s32.totalorder %v1244, 250
        %vm2155 = vcmp.le.s32.totalorder %v1247, 250
        %vm2156 = vcmp.le.s32.totalorder %v1250, 250
        %vm2157 = vcmp.le.s32.totalorder %v1253, 250
        %vm2158 = vcmp.le.s32.totalorder %v1256, 250
        %vm2159 = vcmp.le.s32.totalorder %v1259, 250
        %vm2160 = vcmp.le.s32.totalorder %v1262, 250
        %vm2161 = vcmp.le.s32.totalorder %v1265, 250
        %v2162 = vsel %vm1906, 1.0, 0.0
        %v2163 = vsel %vm1907, 1.0, 0.0
        %v2164 = vsel %vm1908, 1.0, 0.0
        %v2165 = vsel %vm1909, 1.0, 0.0
        %v2166 = vsel %vm1910, 1.0, 0.0
        %v2167 = vsel %vm1911, 1.0, 0.0
        %v2168 = vsel %vm1912, 1.0, 0.0
        %v2169 = vsel %vm1913, 1.0, 0.0
        %v2170 = vsel %vm1914, 1.0, 0.0
        %v2171 = vsel %vm1915, 1.0, 0.0
        %v2172 = vsel %vm1916, 1.0, 0.0
        %v2173 = vsel %vm1917, 1.0, 0.0
        %v2174 = vsel %vm1918, 1.0, 0.0
        %v2175 = vsel %vm1919, 1.0, 0.0
        %v2176 = vsel %vm1920, 1.0, 0.0
        %v2177 = vsel %vm1921, 1.0, 0.0
        %v2178 = vsel %vm1922, 1.0, 0.0
        %v2179 = vsel %vm1923, 1.0, 0.0
        %v2180 = vsel %vm1924, 1.0, 0.0
        %v2181 = vsel %vm1925, 1.0, 0.0
        %v2182 = vsel %vm1926, 1.0, 0.0
        %v2183 = vsel %vm1927, 1.0, 0.0
        %v2184 = vsel %vm1928, 1.0, 0.0
        %v2185 = vsel %vm1929, 1.0, 0.0
        %v2186 = vsel %vm1930, 1.0, 0.0
        %v2187 = vsel %vm1931, 1.0, 0.0
        %v2188 = vsel %vm1932, 1.0, 0.0
        %v2189 = vsel %vm1933, 1.0, 0.0
        %v2190 = vsel %vm1934, 1.0, 0.0
        %v2191 = vsel %vm1935, 1.0, 0.0
        %v2192 = vsel %vm1936, 1.0, 0.0
        %v2193 = vsel %vm1937, 1.0, 0.0
        %v2194 = vsel %vm1938, 1.0, 0.0
        %v2195 = vsel %vm1939, 1.0, 0.0
        %v2196 = vsel %vm1940, 1.0, 0.0
        %v2197 = vsel %vm1941, 1.0, 0.0
        %v2198 = vsel %vm1942, 1.0, 0.0
        %v2199 = vsel %vm1943, 1.0, 0.0
        %v2200 = vsel %vm1944, 1.0, 0.0
        %v2201 = vsel %vm1945, 1.0, 0.0
        %v2202 = vsel %vm1946, 1.0, 0.0
        %v2203 = vsel %vm1947, 1.0, 0.0
        %v2204 = vsel %vm1948, 1.0, 0.0
        %v2205 = vsel %vm1949, 1.0, 0.0
        %v2206 = vsel %vm1950, 1.0, 0.0
        %v2207 = vsel %vm1951, 1.0, 0.0
        %v2208 = vsel %vm1952, 1.0, 0.0
        %v2209 = vsel %vm1953, 1.0, 0.0
        %v2210 = vsel %vm1954, 1.0, 0.0
        %v2211 = vsel %vm1955, 1.0, 0.0
        %v2212 = vsel %vm1956, 1.0, 0.0
        %v2213 = vsel %vm1957, 1.0, 0.0
        %v2214 = vsel %vm1958, 1.0, 0.0
        %v2215 = vsel %vm1959, 1.0, 0.0
        %v2216 = vsel %vm1960, 1.0, 0.0
        %v2217 = vsel %vm1961, 1.0, 0.0
        %v2218 = vsel %vm1962, 1.0, 0.0
        %v2219 = vsel %vm1963, 1.0, 0.0
        %v2220 = vsel %vm1964, 1.0, 0.0
        %v2221 = vsel %vm1965, 1.0, 0.0
        %v2222 = vsel %vm1966, 1.0, 0.0
        %v2223 = vsel %vm1967, 1.0, 0.0
        %v2224 = vsel %vm1968, 1.0, 0.0
        %v2225 = vsel %vm1969, 1.0, 0.0
        %v2226 = vsel %vm1970, 1.0, 0.0
        %v2227 = vsel %vm1971, 1.0, 0.0
        %v2228 = vsel %vm1972, 1.0, 0.0
        %v2229 = vsel %vm1973, 1.0, 0.0
        %v2230 = vsel %vm1974, 1.0, 0.0
        %v2231 = vsel %vm1975, 1.0, 0.0
        %v2232 = vsel %vm1976, 1.0, 0.0
        %v2233 = vsel %vm1977, 1.0, 0.0
        %v2234 = vsel %vm1978, 1.0, 0.0
        %v2235 = vsel %vm1979, 1.0, 0.0
        %v2236 = vsel %vm1980, 1.0, 0.0
        %v2237 = vsel %vm1981, 1.0, 0.0
        %v2238 = vsel %vm1982, 1.0, 0.0
        %v2239 = vsel %vm1983, 1.0, 0.0
        %v2240 = vsel %vm1984, 1.0, 0.0
        %v2241 = vsel %vm1985, 1.0, 0.0
        %v2242 = vsel %vm1986, 1.0, 0.0
        %v2243 = vsel %vm1987, 1.0, 0.0
        %v2244 = vsel %vm1988, 1.0, 0.0
        %v2245 = vsel %vm1989, 1.0, 0.0
        %v2246 = vsel %vm1990, 1.0, 0.0
        %v2247 = vsel %vm1991, 1.0, 0.0
        %v2248 = vsel %vm1992, 1.0, 0.0
        %v2249 = vsel %vm1993, 1.0, 0.0
        %v2250 = vsel %vm1994, 1.0, 0.0
        %v2251 = vsel %vm1995, 1.0, 0.0
        %v2252 = vsel %vm1996, 1.0, 0.0
        %v2253 = vsel %vm1997, 1.0, 0.0
        %v2254 = vsel %vm1998, 1.0, 0.0
        %v2255 = vsel %vm1999, 1.0, 0.0
        %v2256 = vsel %vm2000, 1.0, 0.0
        %v2257 = vsel %vm2001, 1.0, 0.0
        %v2258 = vsel %vm2002, 1.0, 0.0
        %v2259 = vsel %vm2003, 1.0, 0.0
        %v2260 = vsel %vm2004, 1.0, 0.0
        %v2261 = vsel %vm2005, 1.0, 0.0
        %v2262 = vsel %vm2006, 1.0, 0.0
        %v2263 = vsel %vm2007, 1.0, 0.0
        %v2264 = vsel %vm2008, 1.0, 0.0
        %v2265 = vsel %vm2009, 1.0, 0.0
        %v2266 = vsel %vm2010, 1.0, 0.0
        %v2267 = vsel %vm2011, 1.0, 0.0
        %v2268 = vsel %vm2012, 1.0, 0.0
        %v2269 = vsel %vm2013, 1.0, 0.0
        %v2270 = vsel %vm2014, 1.0, 0.0
        %v2271 = vsel %vm2015, 1.0, 0.0
        %v2272 = vsel %vm2016, 1.0, 0.0
        %v2273 = vsel %vm2017, 1.0, 0.0
        %v2274 = vsel %vm2018, 1.0, 0.0
        %v2275 = vsel %vm2019, 1.0, 0.0
        %v2276 = vsel %vm2020, 1.0, 0.0
        %v2277 = vsel %vm2021, 1.0, 0.0
        %v2278 = vsel %vm2022, 1.0, 0.0
        %v2279 = vsel %vm2023, 1.0, 0.0
        %v2280 = vsel %vm2024, 1.0, 0.0
        %v2281 = vsel %vm2025, 1.0, 0.0
        %v2282 = vsel %vm2026, 1.0, 0.0
        %v2283 = vsel %vm2027, 1.0, 0.0
        %v2284 = vsel %vm2028, 1.0, 0.0
        %v2285 = vsel %vm2029, 1.0, 0.0
        %v2286 = vsel %vm2030, 1.0, 0.0
        %v2287 = vsel %vm2031, 1.0, 0.0
        %v2288 = vsel %vm2032, 1.0, 0.0
        %v2289 = vsel %vm2033, 1.0, 0.0
        %v2290 = vsel %vm2034, 1.0, 0.0
        %v2291 = vsel %vm2035, 1.0, 0.0
        %v2292 = vsel %vm2036, 1.0, 0.0
        %v2293 = vsel %vm2037, 1.0, 0.0
        %v2294 = vsel %vm2038, 1.0, 0.0
        %v2295 = vsel %vm2039, 1.0, 0.0
        %v2296 = vsel %vm2040, 1.0, 0.0
        %v2297 = vsel %vm2041, 1.0, 0.0
        %v2298 = vsel %vm2042, 1.0, 0.0
        %v2299 = vsel %vm2043, 1.0, 0.0
        %v2300 = vsel %vm2044, 1.0, 0.0
        %v2301 = vsel %vm2045, 1.0, 0.0
        %v2302 = vsel %vm2046, 1.0, 0.0
        %v2303 = vsel %vm2047, 1.0, 0.0
        %v2304 = vsel %vm2048, 1.0, 0.0
        %v2305 = vsel %vm2049, 1.0, 0.0
        %v2306 = vsel %vm2050, 1.0, 0.0
        %v2307 = vsel %vm2051, 1.0, 0.0
        %v2308 = vsel %vm2052, 1.0, 0.0
        %v2309 = vsel %vm2053, 1.0, 0.0
        %v2310 = vsel %vm2054, 1.0, 0.0
        %v2311 = vsel %vm2055, 1.0, 0.0
        %v2312 = vsel %vm2056, 1.0, 0.0
        %v2313 = vsel %vm2057, 1.0, 0.0
        %v2314 = vsel %vm2058, 1.0, 0.0
        %v2315 = vsel %vm2059, 1.0, 0.0
        %v2316 = vsel %vm2060, 1.0, 0.0
        %v2317 = vsel %vm2061, 1.0, 0.0
        %v2318 = vsel %vm2062, 1.0, 0.0
        %v2319 = vsel %vm2063, 1.0, 0.0
        %v2320 = vsel %vm2064, 1.0, 0.0
        %v2321 = vsel %vm2065, 1.0, 0.0
        %v2322 = vsel %vm2066, 1.0, 0.0
        %v2323 = vsel %vm2067, 1.0, 0.0
        %v2324 = vsel %vm2068, 1.0, 0.0
        %v2325 = vsel %vm2069, 1.0, 0.0
        %v2326 = vsel %vm2070, 1.0, 0.0
        %v2327 = vsel %vm2071, 1.0, 0.0
        %v2328 = vsel %vm2072, 1.0, 0.0
        %v2329 = vsel %vm2073, 1.0, 0.0
        %v2330 = vsel %vm2074, 1.0, 0.0
        %v2331 = vsel %vm2075, 1.0, 0.0
        %v2332 = vsel %vm2076, 1.0, 0.0
        %v2333 = vsel %vm2077, 1.0, 0.0
        %v2334 = vsel %vm2078, 1.0, 0.0
        %v2335 = vsel %vm2079, 1.0, 0.0
        %v2336 = vsel %vm2080, 1.0, 0.0
        %v2337 = vsel %vm2081, 1.0, 0.0
        %v2338 = vsel %vm2082, 1.0, 0.0
        %v2339 = vsel %vm2083, 1.0, 0.0
        %v2340 = vsel %vm2084, 1.0, 0.0
        %v2341 = vsel %vm2085, 1.0, 0.0
        %v2342 = vsel %vm2086, 1.0, 0.0
        %v2343 = vsel %vm2087, 1.0, 0.0
        %v2344 = vsel %vm2088, 1.0, 0.0
        %v2345 = vsel %vm2089, 1.0, 0.0
        %v2346 = vsel %vm2090, 1.0, 0.0
        %v2347 = vsel %vm2091, 1.0, 0.0
        %v2348 = vsel %vm2092, 1.0, 0.0
        %v2349 = vsel %vm2093, 1.0, 0.0
        %v2350 = vsel %vm2094, 1.0, 0.0
        %v2351 = vsel %vm2095, 1.0, 0.0
        %v2352 = vsel %vm2096, 1.0, 0.0
        %v2353 = vsel %vm2097, 1.0, 0.0
        %v2354 = vsel %vm2098, 1.0, 0.0
        %v2355 = vsel %vm2099, 1.0, 0.0
        %v2356 = vsel %vm2100, 1.0, 0.0
        %v2357 = vsel %vm2101, 1.0, 0.0
        %v2358 = vsel %vm2102, 1.0, 0.0
        %v2359 = vsel %vm2103, 1.0, 0.0
        %v2360 = vsel %vm2104, 1.0, 0.0
        %v2361 = vsel %vm2105, 1.0, 0.0
        %v2362 = vsel %vm2106, 1.0, 0.0
        %v2363 = vsel %vm2107, 1.0, 0.0
        %v2364 = vsel %vm2108, 1.0, 0.0
        %v2365 = vsel %vm2109, 1.0, 0.0
        %v2366 = vsel %vm2110, 1.0, 0.0
        %v2367 = vsel %vm2111, 1.0, 0.0
        %v2368 = vsel %vm2112, 1.0, 0.0
        %v2369 = vsel %vm2113, 1.0, 0.0
        %v2370 = vsel %vm2114, 1.0, 0.0
        %v2371 = vsel %vm2115, 1.0, 0.0
        %v2372 = vsel %vm2116, 1.0, 0.0
        %v2373 = vsel %vm2117, 1.0, 0.0
        %v2374 = vsel %vm2118, 1.0, 0.0
        %v2375 = vsel %vm2119, 1.0, 0.0
        %v2376 = vsel %vm2120, 1.0, 0.0
        %v2377 = vsel %vm2121, 1.0, 0.0
        %v2378 = vsel %vm2122, 1.0, 0.0
        %v2379 = vsel %vm2123, 1.0, 0.0
        %v2380 = vsel %vm2124, 1.0, 0.0
        %v2381 = vsel %vm2125, 1.0, 0.0
        %v2382 = vsel %vm2126, 1.0, 0.0
        %v2383 = vsel %vm2127, 1.0, 0.0
        %v2384 = vsel %vm2128, 1.0, 0.0
        %v2385 = vsel %vm2129, 1.0, 0.0
        %v2386 = vsel %vm2130, 1.0, 0.0
        %v2387 = vsel %vm2131, 1.0, 0.0
        %v2388 = vsel %vm2132, 1.0, 0.0
        %v2389 = vsel %vm2133, 1.0, 0.0
        %v2390 = vsel %vm2134, 1.0, 0.0
        %v2391 = vsel %vm2135, 1.0, 0.0
        %v2392 = vsel %vm2136, 1.0, 0.0
        %v2393 = vsel %vm2137, 1.0, 0.0
        %v2394 = vsel %vm2138, 1.0, 0.0
        %v2395 = vsel %vm2139, 1.0, 0.0
        %v2396 = vsel %vm2140, 1.0, 0.0
        %v2397 = vsel %vm2141, 1.0, 0.0
        %v2398 = vsel %vm2142, 1.0, 0.0
        %v2399 = vsel %vm2143, 1.0, 0.0
        %v2400 = vsel %vm2144, 1.0, 0.0
        %v2401 = vsel %vm2145, 1.0, 0.0
        %v2402 = vsel %vm2146, 1.0, 0.0
        %v2403 = vsel %vm2147, 1.0, 0.0
        %v2404 = vsel %vm2148, 1.0, 0.0
        %v2405 = vsel %vm2149, 1.0, 0.0
        %v2406 = vsel %vm2150, 1.0, 0.0
        %v2407 = vsel %vm2151, 1.0, 0.0
        %v2408 = vsel %vm2152, 1.0, 0.0
        %v2409 = vsel %vm2153, 1.0, 0.0
        %v2410 = vsel %vm2154, 1.0, 0.0
        %v2411 = vsel %vm2155, 1.0, 0.0
        %v2412 = vsel %vm2156, 1.0, 0.0
        %v2413 = vsel %vm2157, 1.0, 0.0
        %v2414 = vsel %vm2158, 1.0, 0.0
        %v2415 = vsel %vm2159, 1.0, 0.0
        %v2416 = vsel %vm2160, 1.0, 0.0
        %v2417 = vsel %vm2161, 1.0, 0.0
        %v2418 = vpack.c.bf16 %v2166, %v2162
        %v2419 = vpack.c.bf16 %v2167, %v2163
        %v2420 = vpack.c.bf16 %v2168, %v2164
        %v2421 = vpack.c.bf16 %v2169, %v2165
        %v2422 = vpack.c.bf16 %v2174, %v2170
        %v2423 = vpack.c.bf16 %v2175, %v2171
        %v2424 = vpack.c.bf16 %v2176, %v2172
        %v2425 = vpack.c.bf16 %v2177, %v2173
        %v2426 = vpack.c.bf16 %v2182, %v2178
        %v2427 = vpack.c.bf16 %v2183, %v2179
        %v2428 = vpack.c.bf16 %v2184, %v2180
        %v2429 = vpack.c.bf16 %v2185, %v2181
        %v2430 = vpack.c.bf16 %v2190, %v2186
        %v2431 = vpack.c.bf16 %v2191, %v2187
        %v2432 = vpack.c.bf16 %v2192, %v2188
        %v2433 = vpack.c.bf16 %v2193, %v2189
        %v2434 = vpack.c.bf16 %v2198, %v2194
        %v2435 = vpack.c.bf16 %v2199, %v2195
        %v2436 = vpack.c.bf16 %v2200, %v2196
        %v2437 = vpack.c.bf16 %v2201, %v2197
        %v2438 = vpack.c.bf16 %v2206, %v2202
        %v2439 = vpack.c.bf16 %v2207, %v2203
        %v2440 = vpack.c.bf16 %v2208, %v2204
        %v2441 = vpack.c.bf16 %v2209, %v2205
        %v2442 = vpack.c.bf16 %v2214, %v2210
        %v2443 = vpack.c.bf16 %v2215, %v2211
        %v2444 = vpack.c.bf16 %v2216, %v2212
        %v2445 = vpack.c.bf16 %v2217, %v2213
        %v2446 = vpack.c.bf16 %v2222, %v2218
        %v2447 = vpack.c.bf16 %v2223, %v2219
        %v2448 = vpack.c.bf16 %v2224, %v2220
        %v2449 = vpack.c.bf16 %v2225, %v2221
        %v2450 = vpack.c.bf16 %v2230, %v2226
        %v2451 = vpack.c.bf16 %v2231, %v2227
        %v2452 = vpack.c.bf16 %v2232, %v2228
        %v2453 = vpack.c.bf16 %v2233, %v2229
        %v2454 = vpack.c.bf16 %v2238, %v2234
        %v2455 = vpack.c.bf16 %v2239, %v2235
        %v2456 = vpack.c.bf16 %v2240, %v2236
        %v2457 = vpack.c.bf16 %v2241, %v2237
        %v2458 = vpack.c.bf16 %v2246, %v2242
        %v2459 = vpack.c.bf16 %v2247, %v2243
        %v2460 = vpack.c.bf16 %v2248, %v2244
        %v2461 = vpack.c.bf16 %v2249, %v2245
        %v2462 = vpack.c.bf16 %v2254, %v2250
        %v2463 = vpack.c.bf16 %v2255, %v2251
        %v2464 = vpack.c.bf16 %v2256, %v2252
        %v2465 = vpack.c.bf16 %v2257, %v2253
        %v2466 = vpack.c.bf16 %v2262, %v2258
        %v2467 = vpack.c.bf16 %v2263, %v2259
        %v2468 = vpack.c.bf16 %v2264, %v2260
        %v2469 = vpack.c.bf16 %v2265, %v2261
        %v2470 = vpack.c.bf16 %v2270, %v2266
        %v2471 = vpack.c.bf16 %v2271, %v2267
        %v2472 = vpack.c.bf16 %v2272, %v2268
        %v2473 = vpack.c.bf16 %v2273, %v2269
        %v2474 = vpack.c.bf16 %v2278, %v2274
        %v2475 = vpack.c.bf16 %v2279, %v2275
        %v2476 = vpack.c.bf16 %v2280, %v2276
        %v2477 = vpack.c.bf16 %v2281, %v2277
        %v2478 = vpack.c.bf16 %v2286, %v2282
        %v2479 = vpack.c.bf16 %v2287, %v2283
        %v2480 = vpack.c.bf16 %v2288, %v2284
        %v2481 = vpack.c.bf16 %v2289, %v2285
        %v2482 = vpack.c.bf16 %v2294, %v2290
        %v2483 = vpack.c.bf16 %v2295, %v2291
        %v2484 = vpack.c.bf16 %v2296, %v2292
        %v2485 = vpack.c.bf16 %v2297, %v2293
        %v2486 = vpack.c.bf16 %v2302, %v2298
        %v2487 = vpack.c.bf16 %v2303, %v2299
        %v2488 = vpack.c.bf16 %v2304, %v2300
        %v2489 = vpack.c.bf16 %v2305, %v2301
        %v2490 = vpack.c.bf16 %v2310, %v2306
        %v2491 = vpack.c.bf16 %v2311, %v2307
        %v2492 = vpack.c.bf16 %v2312, %v2308
        %v2493 = vpack.c.bf16 %v2313, %v2309
        %v2494 = vpack.c.bf16 %v2318, %v2314
        %v2495 = vpack.c.bf16 %v2319, %v2315
        %v2496 = vpack.c.bf16 %v2320, %v2316
        %v2497 = vpack.c.bf16 %v2321, %v2317
        %v2498 = vpack.c.bf16 %v2326, %v2322
        %v2499 = vpack.c.bf16 %v2327, %v2323
        %v2500 = vpack.c.bf16 %v2328, %v2324
        %v2501 = vpack.c.bf16 %v2329, %v2325
        %v2502 = vpack.c.bf16 %v2334, %v2330
        %v2503 = vpack.c.bf16 %v2335, %v2331
        %v2504 = vpack.c.bf16 %v2336, %v2332
        %v2505 = vpack.c.bf16 %v2337, %v2333
        %v2506 = vpack.c.bf16 %v2342, %v2338
        %v2507 = vpack.c.bf16 %v2343, %v2339
        %v2508 = vpack.c.bf16 %v2344, %v2340
        %v2509 = vpack.c.bf16 %v2345, %v2341
        %v2510 = vpack.c.bf16 %v2350, %v2346
        %v2511 = vpack.c.bf16 %v2351, %v2347
        %v2512 = vpack.c.bf16 %v2352, %v2348
        %v2513 = vpack.c.bf16 %v2353, %v2349
        %v2514 = vpack.c.bf16 %v2358, %v2354
        %v2515 = vpack.c.bf16 %v2359, %v2355
        %v2516 = vpack.c.bf16 %v2360, %v2356
        %v2517 = vpack.c.bf16 %v2361, %v2357
        %v2518 = vpack.c.bf16 %v2366, %v2362
        %v2519 = vpack.c.bf16 %v2367, %v2363
        %v2520 = vpack.c.bf16 %v2368, %v2364
        %v2521 = vpack.c.bf16 %v2369, %v2365
        %v2522 = vpack.c.bf16 %v2374, %v2370
        %v2523 = vpack.c.bf16 %v2375, %v2371
        %v2524 = vpack.c.bf16 %v2376, %v2372
        %v2525 = vpack.c.bf16 %v2377, %v2373
        %v2526 = vpack.c.bf16 %v2382, %v2378
        %v2527 = vpack.c.bf16 %v2383, %v2379
        %v2528 = vpack.c.bf16 %v2384, %v2380
        %v2529 = vpack.c.bf16 %v2385, %v2381
        %v2530 = vpack.c.bf16 %v2390, %v2386
        %v2531 = vpack.c.bf16 %v2391, %v2387
        %v2532 = vpack.c.bf16 %v2392, %v2388
        %v2533 = vpack.c.bf16 %v2393, %v2389
        %v2534 = vpack.c.bf16 %v2398, %v2394
        %v2535 = vpack.c.bf16 %v2399, %v2395
        %v2536 = vpack.c.bf16 %v2400, %v2396
        %v2537 = vpack.c.bf16 %v2401, %v2397
        %v2538 = vpack.c.bf16 %v2406, %v2402
        %v2539 = vpack.c.bf16 %v2407, %v2403
        %v2540 = vpack.c.bf16 %v2408, %v2404
        %v2541 = vpack.c.bf16 %v2409, %v2405
        %v2542 = vpack.c.bf16 %v2414, %v2410
        %v2543 = vpack.c.bf16 %v2415, %v2411
        %v2544 = vpack.c.bf16 %v2416, %v2412
        %v2545 = vpack.c.bf16 %v2417, %v2413
        %v2546 = vpack.c.bf16 %v168, %v168
        %v2547 = vpack.c.bf16 %v169, %v169
        %v2548 = vpack.c.bf16 %v170, %v170
        %v2549 = vpack.c.bf16 %v171, %v171
        %2550 = vmatprep.subr.bf16.mxu0 %v1779
        %2551 = vmatpush1.bf16.msra.mxu0 %v1778
        %2552 = vmatprep.subr.bf16.mxu0 %v1783
        %2553 = vmatpush1.bf16.msra.mxu0 %v1782
        %2554 = vmatprep.subr.bf16.mxu0 %v1787
        %2555 = vmatpush1.bf16.msra.mxu0 %v1786
        %2556 = vmatprep.subr.bf16.mxu0 %v1791
        %2557 = vmatpush1.bf16.msra.mxu0 %v1790
        %2558 = vmatprep.subr.bf16.mxu0 %v1795
        %2559 = vmatpush1.bf16.msra.mxu0 %v1794
        %2560 = vmatprep.subr.bf16.mxu0 %v1799
        %2561 = vmatpush1.bf16.msra.mxu0 %v1798
        %2562 = vmatprep.subr.bf16.mxu0 %v1803
        %2563 = vmatpush1.bf16.msra.mxu0 %v1802
        %2564 = vmatprep.subr.bf16.mxu0 %v1807
        %2565 = vmatpush1.bf16.msra.mxu0 %v1806
        %2566 = vmatprep.subr.bf16.mxu0 %v1811
        %2567 = vmatpush1.bf16.msra.mxu0 %v1810
        %2568 = vmatprep.subr.bf16.mxu0 %v1815
        %2569 = vmatpush1.bf16.msra.mxu0 %v1814
        %2570 = vmatprep.subr.bf16.mxu0 %v1819
        %2571 = vmatpush1.bf16.msra.mxu0 %v1818
        %2572 = vmatprep.subr.bf16.mxu0 %v1823
        %2573 = vmatpush1.bf16.msra.mxu0 %v1822
        %2574 = vmatprep.subr.bf16.mxu0 %v1827
        %2575 = vmatpush1.bf16.msra.mxu0 %v1826
        %2576 = vmatprep.subr.bf16.mxu0 %v1831
        %2577 = vmatpush1.bf16.msra.mxu0 %v1830
        %2578 = vmatprep.subr.bf16.mxu0 %v1835
        %2579 = vmatpush1.bf16.msra.mxu0 %v1834
        %2580 = vmatprep.subr.bf16.mxu0 %v1839
        %2581 = vmatpush1.bf16.msra.mxu0 %v1838
        %2582 = vmatprep.mubr.bf16.mxu0 %v2547
        %2583 = vmatmul.mubr.bf16.gmra.mrb[0].mxu0 %v2546
        %v2584 = vpop.f32.mrb[0].mxu0
        %v2585 = vadd.f32 0.0, %v2584
        %v2586 = vpop.f32.mrb[0].mxu0
        %v2587 = vadd.f32 0.0, %v2586
        %v2588 = vpop.f32.mrb[0].mxu0
        %v2589 = vpop.f32.mrb[0].mxu0
        %2590 = vdwg.mxu0
        %2591 = vmatprep.subr.bf16.mxu0 %v1843
        %2592 = vmatpush1.bf16.msra.mxu0 %v1842
        %2593 = vmatprep.subr.bf16.mxu0 %v1847
        %2594 = vmatpush1.bf16.msra.mxu0 %v1846
        %2595 = vmatprep.subr.bf16.mxu0 %v1851
        %2596 = vmatpush1.bf16.msra.mxu0 %v1850
        %2597 = vmatprep.subr.bf16.mxu0 %v1855
        %2598 = vmatpush1.bf16.msra.mxu0 %v1854
        %2599 = vmatprep.subr.bf16.mxu0 %v1859
        %2600 = vmatpush1.bf16.msra.mxu0 %v1858
        %2601 = vmatprep.subr.bf16.mxu0 %v1863
        %2602 = vmatpush1.bf16.msra.mxu0 %v1862
        %2603 = vmatprep.subr.bf16.mxu0 %v1867
        %2604 = vmatpush1.bf16.msra.mxu0 %v1866
        %2605 = vmatprep.subr.bf16.mxu0 %v1871
        %2606 = vmatpush1.bf16.msra.mxu0 %v1870
        %2607 = vmatprep.subr.bf16.mxu0 %v1875
        %2608 = vmatpush1.bf16.msra.mxu0 %v1874
        %2609 = vmatprep.subr.bf16.mxu0 %v1879
        %2610 = vmatpush1.bf16.msra.mxu0 %v1878
        %2611 = vmatprep.subr.bf16.mxu0 %v1883
        %2612 = vmatpush1.bf16.msra.mxu0 %v1882
        %2613 = vmatprep.subr.bf16.mxu0 %v1887
        %2614 = vmatpush1.bf16.msra.mxu0 %v1886
        %2615 = vmatprep.subr.bf16.mxu0 %v1891
        %2616 = vmatpush1.bf16.msra.mxu0 %v1890
        %2617 = vmatprep.subr.bf16.mxu0 %v1895
        %2618 = vmatpush1.bf16.msra.mxu0 %v1894
        %2619 = vmatprep.subr.bf16.mxu0 %v1899
        %2620 = vmatpush1.bf16.msra.mxu0 %v1898
        %2621 = vmatprep.subr.bf16.mxu0 %v1903
        %2622 = vmatpush1.bf16.msra.mxu0 %v1902
        %2623 = vmatprep.mubr.bf16.mxu0 %v2549
        %2624 = vmatmul.mubr.bf16.gmra.mrb[0].mxu0 %v2548
        %v2625 = vpop.f32.mrb[0].mxu0
        %v2626 = vadd.f32 %v2585, %v2625
        %v2627 = vpop.f32.mrb[0].mxu0
        %v2628 = vadd.f32 %v2587, %v2627
        %v2629 = vpop.f32.mrb[0].mxu0
        %v2630 = vpop.f32.mrb[0].mxu0
        %2631 = vdwg.mxu0
        %2632 = vmatprep.subr.bf16.mxu0 %v1781
        %2633 = vmatpush1.bf16.msra.mxu0 %v1780
        %2634 = vmatprep.subr.bf16.mxu0 %v1785
        %2635 = vmatpush1.bf16.msra.mxu0 %v1784
        %2636 = vmatprep.subr.bf16.mxu0 %v1789
        %2637 = vmatpush1.bf16.msra.mxu0 %v1788
        %2638 = vmatprep.subr.bf16.mxu0 %v1793
        %2639 = vmatpush1.bf16.msra.mxu0 %v1792
        %2640 = vmatprep.subr.bf16.mxu0 %v1797
        %2641 = vmatpush1.bf16.msra.mxu0 %v1796
        %2642 = vmatprep.subr.bf16.mxu0 %v1801
        %2643 = vmatpush1.bf16.msra.mxu0 %v1800
        %2644 = vmatprep.subr.bf16.mxu0 %v1805
        %2645 = vmatpush1.bf16.msra.mxu0 %v1804
        %2646 = vmatprep.subr.bf16.mxu0 %v1809
        %2647 = vmatpush1.bf16.msra.mxu0 %v1808
        %2648 = vmatprep.subr.bf16.mxu0 %v1813
        %2649 = vmatpush1.bf16.msra.mxu0 %v1812
        %2650 = vmatprep.subr.bf16.mxu0 %v1817
        %2651 = vmatpush1.bf16.msra.mxu0 %v1816
        %2652 = vmatprep.subr.bf16.mxu0 %v1821
        %2653 = vmatpush1.bf16.msra.mxu0 %v1820
        %2654 = vmatprep.subr.bf16.mxu0 %v1825
        %2655 = vmatpush1.bf16.msra.mxu0 %v1824
        %2656 = vmatprep.subr.bf16.mxu0 %v1829
        %2657 = vmatpush1.bf16.msra.mxu0 %v1828
        %2658 = vmatprep.subr.bf16.mxu0 %v1833
        %2659 = vmatpush1.bf16.msra.mxu0 %v1832
        %2660 = vmatprep.subr.bf16.mxu0 %v1837
        %2661 = vmatpush1.bf16.msra.mxu0 %v1836
        %2662 = vmatprep.subr.bf16.mxu0 %v1841
        %2663 = vmatpush1.bf16.msra.mxu0 %v1840
        %2664 = vmatprep.mubr.bf16.mxu0 %v2547
        %2665 = vmatmul.mubr.bf16.gmra.mrb[0].mxu0 %v2546
        %v2666 = vpop.f32.mrb[0].mxu0
        %v2667 = vadd.f32 0.0, %v2666
        %v2668 = vpop.f32.mrb[0].mxu0
        %v2669 = vadd.f32 0.0, %v2668
        %v2670 = vpop.f32.mrb[0].mxu0
        %v2671 = vpop.f32.mrb[0].mxu0
        %2672 = vdwg.mxu0
        %2673 = vmatprep.subr.bf16.mxu0 %v1845
        %2674 = vmatpush1.bf16.msra.mxu0 %v1844
        %2675 = vmatprep.subr.bf16.mxu0 %v1849
        %2676 = vmatpush1.bf16.msra.mxu0 %v1848
        %2677 = vmatprep.subr.bf16.mxu0 %v1853
        %2678 = vmatpush1.bf16.msra.mxu0 %v1852
        %2679 = vmatprep.subr.bf16.mxu0 %v1857
        %2680 = vmatpush1.bf16.msra.mxu0 %v1856
        %2681 = vmatprep.subr.bf16.mxu0 %v1861
        %2682 = vmatpush1.bf16.msra.mxu0 %v1860
        %2683 = vmatprep.subr.bf16.mxu0 %v1865
        %2684 = vmatpush1.bf16.msra.mxu0 %v1864
        %2685 = vmatprep.subr.bf16.mxu0 %v1869
        %2686 = vmatpush1.bf16.msra.mxu0 %v1868
        %2687 = vmatprep.subr.bf16.mxu0 %v1873
        %2688 = vmatpush1.bf16.msra.mxu0 %v1872
        %2689 = vmatprep.subr.bf16.mxu0 %v1877
        %2690 = vmatpush1.bf16.msra.mxu0 %v1876
        %2691 = vmatprep.subr.bf16.mxu0 %v1881
        %2692 = vmatpush1.bf16.msra.mxu0 %v1880
        %2693 = vmatprep.subr.bf16.mxu0 %v1885
        %2694 = vmatpush1.bf16.msra.mxu0 %v1884
        %2695 = vmatprep.subr.bf16.mxu0 %v1889
        %2696 = vmatpush1.bf16.msra.mxu0 %v1888
        %2697 = vmatprep.subr.bf16.mxu0 %v1893
        %2698 = vmatpush1.bf16.msra.mxu0 %v1892
        %2699 = vmatprep.subr.bf16.mxu0 %v1897
        %2700 = vmatpush1.bf16.msra.mxu0 %v1896
        %2701 = vmatprep.subr.bf16.mxu0 %v1901
        %2702 = vmatpush1.bf16.msra.mxu0 %v1900
        %2703 = vmatprep.subr.bf16.mxu0 %v1905
        %2704 = vmatpush1.bf16.msra.mxu0 %v1904
        %2705 = vmatprep.mubr.bf16.mxu0 %v2549
        %2706 = vmatmul.mubr.bf16.gmra.mrb[0].mxu0 %v2548
        %v2707 = vpop.f32.mrb[0].mxu0
        %v2708 = vadd.f32 %v2667, %v2707
        %v2709 = vpop.f32.mrb[0].mxu0
        %v2710 = vadd.f32 %v2669, %v2709
        %v2711 = vpop.f32.mrb[0].mxu0
        %v2712 = vpop.f32.mrb[0].mxu0
        %2713 = vdwg.mxu0
        %v2714 = vmul.f32 %v2626, 0.003984064
        %v2715 = vmul.f32 %v2628, 0.003984064
        %v2716 = vmul.f32 %v2708, 0.003984064
        %v2717 = vmul.f32 %v2710, 0.003984064
        %v2718 = vsub.f32 %v168, %v2714
        %v2719 = vsub.f32 %v169, %v2715
        %v2720 = vsub.f32 %v170, %v2716
        %v2721 = vsub.f32 %v171, %v2717
        %v2722 = vmul.f32 %v2718, %v2718
        %v2723 = vmul.f32 %v2719, %v2719
        %v2724 = vmul.f32 %v2720, %v2720
        %v2725 = vmul.f32 %v2721, %v2721
        %v2726 = vpack.c.bf16 %v2722, %v2722
        %v2727 = vpack.c.bf16 %v2723, %v2723
        %v2728 = vpack.c.bf16 %v2724, %v2724
        %v2729 = vpack.c.bf16 %v2725, %v2725
        %2730 = vmatprep.subr.bf16.mxu0 %v2419
        %2731 = vmatpush1.bf16.msra.mxu0 %v2418
        %2732 = vmatprep.subr.bf16.mxu0 %v2423
        %2733 = vmatpush1.bf16.msra.mxu0 %v2422
        %2734 = vmatprep.subr.bf16.mxu0 %v2427
        %2735 = vmatpush1.bf16.msra.mxu0 %v2426
        %2736 = vmatprep.subr.bf16.mxu0 %v2431
        %2737 = vmatpush1.bf16.msra.mxu0 %v2430
        %2738 = vmatprep.subr.bf16.mxu0 %v2435
        %2739 = vmatpush1.bf16.msra.mxu0 %v2434
        %2740 = vmatprep.subr.bf16.mxu0 %v2439
        %2741 = vmatpush1.bf16.msra.mxu0 %v2438
        %2742 = vmatprep.subr.bf16.mxu0 %v2443
        %2743 = vmatpush1.bf16.msra.mxu0 %v2442
        %2744 = vmatprep.subr.bf16.mxu0 %v2447
        %2745 = vmatpush1.bf16.msra.mxu0 %v2446
        %2746 = vmatprep.subr.bf16.mxu0 %v2451
        %2747 = vmatpush1.bf16.msra.mxu0 %v2450
        %2748 = vmatprep.subr.bf16.mxu0 %v2455
        %2749 = vmatpush1.bf16.msra.mxu0 %v2454
        %2750 = vmatprep.subr.bf16.mxu0 %v2459
        %2751 = vmatpush1.bf16.msra.mxu0 %v2458
        %2752 = vmatprep.subr.bf16.mxu0 %v2463
        %2753 = vmatpush1.bf16.msra.mxu0 %v2462
        %2754 = vmatprep.subr.bf16.mxu0 %v2467
        %2755 = vmatpush1.bf16.msra.mxu0 %v2466
        %2756 = vmatprep.subr.bf16.mxu0 %v2471
        %2757 = vmatpush1.bf16.msra.mxu0 %v2470
        %2758 = vmatprep.subr.bf16.mxu0 %v2475
        %2759 = vmatpush1.bf16.msra.mxu0 %v2474
        %2760 = vmatprep.subr.bf16.mxu0 %v2479
        %2761 = vmatpush1.bf16.msra.mxu0 %v2478
        %2762 = vmatprep.mubr.bf16.mxu0 %v2727
        %2763 = vmatmul.mubr.bf16.gmra.mrb[0].mxu0 %v2726
        %v2764 = vpop.f32.mrb[0].mxu0
        %v2765 = vadd.f32 0.0, %v2764
        %v2766 = vpop.f32.mrb[0].mxu0
        %v2767 = vadd.f32 0.0, %v2766
        %v2768 = vpop.f32.mrb[0].mxu0
        %v2769 = vpop.f32.mrb[0].mxu0
        %2770 = vdwg.mxu0
        %2771 = vmatprep.subr.bf16.mxu0 %v2483
        %2772 = vmatpush1.bf16.msra.mxu0 %v2482
        %2773 = vmatprep.subr.bf16.mxu0 %v2487
        %2774 = vmatpush1.bf16.msra.mxu0 %v2486
        %2775 = vmatprep.subr.bf16.mxu0 %v2491
        %2776 = vmatpush1.bf16.msra.mxu0 %v2490
        %2777 = vmatprep.subr.bf16.mxu0 %v2495
        %2778 = vmatpush1.bf16.msra.mxu0 %v2494
        %2779 = vmatprep.subr.bf16.mxu0 %v2499
        %2780 = vmatpush1.bf16.msra.mxu0 %v2498
        %2781 = vmatprep.subr.bf16.mxu0 %v2503
        %2782 = vmatpush1.bf16.msra.mxu0 %v2502
        %2783 = vmatprep.subr.bf16.mxu0 %v2507
        %2784 = vmatpush1.bf16.msra.mxu0 %v2506
        %2785 = vmatprep.subr.bf16.mxu0 %v2511
        %2786 = vmatpush1.bf16.msra.mxu0 %v2510
        %2787 = vmatprep.subr.bf16.mxu0 %v2515
        %2788 = vmatpush1.bf16.msra.mxu0 %v2514
        %2789 = vmatprep.subr.bf16.mxu0 %v2519
        %2790 = vmatpush1.bf16.msra.mxu0 %v2518
        %2791 = vmatprep.subr.bf16.mxu0 %v2523
        %2792 = vmatpush1.bf16.msra.mxu0 %v2522
        %2793 = vmatprep.subr.bf16.mxu0 %v2527
        %2794 = vmatpush1.bf16.msra.mxu0 %v2526
        %2795 = vmatprep.subr.bf16.mxu0 %v2531
        %2796 = vmatpush1.bf16.msra.mxu0 %v2530
        %2797 = vmatprep.subr.bf16.mxu0 %v2535
        %2798 = vmatpush1.bf16.msra.mxu0 %v2534
        %2799 = vmatprep.subr.bf16.mxu0 %v2539
        %2800 = vmatpush1.bf16.msra.mxu0 %v2538
        %2801 = vmatprep.subr.bf16.mxu0 %v2543
        %2802 = vmatpush1.bf16.msra.mxu0 %v2542
        %2803 = vmatprep.mubr.bf16.mxu0 %v2729
        %2804 = vmatmul.mubr.bf16.gmra.mrb[0].mxu0 %v2728
        %v2805 = vpop.f32.mrb[0].mxu0
        %v2806 = vadd.f32 %v2765, %v2805
        %v2807 = vpop.f32.mrb[0].mxu0
        %v2808 = vadd.f32 %v2767, %v2807
        %v2809 = vpop.f32.mrb[0].mxu0
        %v2810 = vpop.f32.mrb[0].mxu0
        %2811 = vdwg.mxu0
        %2812 = vmatprep.subr.bf16.mxu0 %v2421
        %2813 = vmatpush1.bf16.msra.mxu0 %v2420
        %2814 = vmatprep.subr.bf16.mxu0 %v2425
        %2815 = vmatpush1.bf16.msra.mxu0 %v2424
        %2816 = vmatprep.subr.bf16.mxu0 %v2429
        %2817 = vmatpush1.bf16.msra.mxu0 %v2428
        %2818 = vmatprep.subr.bf16.mxu0 %v2433
        %2819 = vmatpush1.bf16.msra.mxu0 %v2432
        %2820 = vmatprep.subr.bf16.mxu0 %v2437
        %2821 = vmatpush1.bf16.msra.mxu0 %v2436
        %2822 = vmatprep.subr.bf16.mxu0 %v2441
        %2823 = vmatpush1.bf16.msra.mxu0 %v2440
        %2824 = vmatprep.subr.bf16.mxu0 %v2445
        %2825 = vmatpush1.bf16.msra.mxu0 %v2444
        %2826 = vmatprep.subr.bf16.mxu0 %v2449
        %2827 = vmatpush1.bf16.msra.mxu0 %v2448
        %2828 = vmatprep.subr.bf16.mxu0 %v2453
        %2829 = vmatpush1.bf16.msra.mxu0 %v2452
        %2830 = vmatprep.subr.bf16.mxu0 %v2457
        %2831 = vmatpush1.bf16.msra.mxu0 %v2456
        %2832 = vmatprep.subr.bf16.mxu0 %v2461
        %2833 = vmatpush1.bf16.msra.mxu0 %v2460
        %2834 = vmatprep.subr.bf16.mxu0 %v2465
        %2835 = vmatpush1.bf16.msra.mxu0 %v2464
        %2836 = vmatprep.subr.bf16.mxu0 %v2469
        %2837 = vmatpush1.bf16.msra.mxu0 %v2468
        %2838 = vmatprep.subr.bf16.mxu0 %v2473
        %2839 = vmatpush1.bf16.msra.mxu0 %v2472
        %2840 = vmatprep.subr.bf16.mxu0 %v2477
        %2841 = vmatpush1.bf16.msra.mxu0 %v2476
        %2842 = vmatprep.subr.bf16.mxu0 %v2481
        %2843 = vmatpush1.bf16.msra.mxu0 %v2480
        %2844 = vmatprep.mubr.bf16.mxu0 %v2727
        %2845 = vmatmul.mubr.bf16.gmra.mrb[0].mxu0 %v2726
        %v2846 = vpop.f32.mrb[0].mxu0
        %v2847 = vadd.f32 0.0, %v2846
        %v2848 = vpop.f32.mrb[0].mxu0
        %v2849 = vadd.f32 0.0, %v2848
        %v2850 = vpop.f32.mrb[0].mxu0
        %v2851 = vpop.f32.mrb[0].mxu0
        %2852 = vdwg.mxu0
        %2853 = vmatprep.subr.bf16.mxu0 %v2485
        %2854 = vmatpush1.bf16.msra.mxu0 %v2484
        %2855 = vmatprep.subr.bf16.mxu0 %v2489
        %2856 = vmatpush1.bf16.msra.mxu0 %v2488
        %2857 = vmatprep.subr.bf16.mxu0 %v2493
        %2858 = vmatpush1.bf16.msra.mxu0 %v2492
        %2859 = vmatprep.subr.bf16.mxu0 %v2497
        %2860 = vmatpush1.bf16.msra.mxu0 %v2496
        %2861 = vmatprep.subr.bf16.mxu0 %v2501
        %2862 = vmatpush1.bf16.msra.mxu0 %v2500
        %2863 = vmatprep.subr.bf16.mxu0 %v2505
        %2864 = vmatpush1.bf16.msra.mxu0 %v2504
        %2865 = vmatprep.subr.bf16.mxu0 %v2509
        %2866 = vmatpush1.bf16.msra.mxu0 %v2508
        %2867 = vmatprep.subr.bf16.mxu0 %v2513
        %2868 = vmatpush1.bf16.msra.mxu0 %v2512
        %2869 = vmatprep.subr.bf16.mxu0 %v2517
        %2870 = vmatpush1.bf16.msra.mxu0 %v2516
        %2871 = vmatprep.subr.bf16.mxu0 %v2521
        %2872 = vmatpush1.bf16.msra.mxu0 %v2520
        %2873 = vmatprep.subr.bf16.mxu0 %v2525
        %2874 = vmatpush1.bf16.msra.mxu0 %v2524
        %2875 = vmatprep.subr.bf16.mxu0 %v2529
        %2876 = vmatpush1.bf16.msra.mxu0 %v2528
        %2877 = vmatprep.subr.bf16.mxu0 %v2533
        %2878 = vmatpush1.bf16.msra.mxu0 %v2532
        %2879 = vmatprep.subr.bf16.mxu0 %v2537
        %2880 = vmatpush1.bf16.msra.mxu0 %v2536
        %2881 = vmatprep.subr.bf16.mxu0 %v2541
        %2882 = vmatpush1.bf16.msra.mxu0 %v2540
        %2883 = vmatprep.subr.bf16.mxu0 %v2545
        %2884 = vmatpush1.bf16.msra.mxu0 %v2544
        %2885 = vmatprep.mubr.bf16.mxu0 %v2729
        %2886 = vmatmul.mubr.bf16.gmra.mrb[0].mxu0 %v2728
        %v2887 = vpop.f32.mrb[0].mxu0
        %v2888 = vadd.f32 %v2847, %v2887
        %v2889 = vpop.f32.mrb[0].mxu0
        %v2890 = vadd.f32 %v2849, %v2889
        %v2891 = vpop.f32.mrb[0].mxu0
        %v2892 = vpop.f32.mrb[0].mxu0
        %2893 = vdwg.mxu0
        %v2894 = vmul.f32 %v2806, 0.001996008
        %v2895 = vmul.f32 %v2808, 0.001996008
        %v2896 = vmul.f32 %v2888, 0.001996008
        %v2897 = vmul.f32 %v2890, 0.001996008
        %v2898 = vrsqrt.pop %v2894
        %v2899 = vmul.f32 %v2894, %v2898
        %vm2900 = vcmp.eq.f32.partialorder %v2894, inf
        %v2901 = vsel %vm2900, %v2894, %v2899
        %vm2902 = vcmp.eq.f32.partialorder %v2894, 0.0
        %v2903 = vand.u32 %v2894, 2147483648
        %v2904 = vsel %vm2902, %v2903, %v2901
        %v2905 = vrsqrt.pop %v2895
        %v2906 = vmul.f32 %v2895, %v2905
        %vm2907 = vcmp.eq.f32.partialorder %v2895, inf
        %v2908 = vsel %vm2907, %v2895, %v2906
        %vm2909 = vcmp.eq.f32.partialorder %v2895, 0.0
        %v2910 = vand.u32 %v2895, 2147483648
        %v2911 = vsel %vm2909, %v2910, %v2908
        %v2912 = vrsqrt.pop %v2896
        %v2913 = vmul.f32 %v2896, %v2912
        %vm2914 = vcmp.eq.f32.partialorder %v2896, inf
        %v2915 = vsel %vm2914, %v2896, %v2913
        %vm2916 = vcmp.eq.f32.partialorder %v2896, 0.0
        %v2917 = vand.u32 %v2896, 2147483648
        %v2918 = vsel %vm2916, %v2917, %v2915
        %v2919 = vrsqrt.pop %v2897
        %v2920 = vmul.f32 %v2897, %v2919
        %vm2921 = vcmp.eq.f32.partialorder %v2897, inf
        %v2922 = vsel %vm2921, %v2897, %v2920
        %vm2923 = vcmp.eq.f32.partialorder %v2897, 0.0
        %v2924 = vand.u32 %v2897, 2147483648
        %v2925 = vsel %vm2923, %v2924, %v2922
        %v2926 = vadd.f32 %v2904, 1e-05
        %v2927 = vadd.f32 %v2911, 1e-05
        %v2928 = vadd.f32 %v2918, 1e-05
        %v2929 = vadd.f32 %v2925, 1e-05
        %v2930 = vrcp.pop %v2926
        %v2931 = vmul.f32 %v2718, %v2930
        %v2932 = vrcp.pop %v2927
        %v2933 = vmul.f32 %v2719, %v2932
        %v2934 = vrcp.pop %v2928
        %v2935 = vmul.f32 %v2720, %v2934
        %v2936 = vrcp.pop %v2929
        %v2937 = vmul.f32 %v2721, %v2936
        %2938 = vst [vmem:[%s132] sm:$0xff] %v2931
        %2939 = vst [vmem:[%s132 + $0x8] sm:$0xff] %v2933
        %2940 = vst [vmem:[%s132 + $0x10] sm:$0xff] %v2935
        %2941 = vst [vmem:[%s132 + $0x18] sm:$0xff] %v2937
        %s2942 = sand.u32 %s52, 1
        %s2943 = scalar_lea.sflag [#allocation4], %s2942
        %s2944 = sand.u32 %s52, 1
        %s2945 = smul.addr %s2944, 32
        %s2946 = scalar_lea.vmem [#allocation5], %s2945
        // Predicated region
        $region29: #{tpu_custom_call.1} parent=23 // pred_check
          %p2947 = pneg %p62
        $region30: #{tpu_custom_call.1} parent=23 // pred_check_branch
          %2949 = sbr.rel (%p2947) target = $region32
        $region31: #{tpu_custom_call.1} parent=23 // pred_region
          %s2951 = ssub.s32 512, 512
          %2952 = vsyncadd %s2943, %s2951
          %s2953 = smul.addr %s18, 4
          %s2954 = smul.addr %s2953, 128
          %s2955 = scalar_lea.hbm %s1, %s2954
          %s2957 = sshll.u32 %s2946, 4
          %s2958 = int_to_ptr.vmem [resolvable:$true] %s2957
          %2960 = dma.vmem_to_hbm [thread:$0]  %s2958, 512, %s2955, %s2943
        $region32: #{tpu_custom_call.1} parent=23 // pred_fallthru
          _
      $region24: #{tpu_custom_call.1} parent=5 // pred_fallthru
        _
      %p2961 = scmp.le.s32.totalorder 2, %s13
      // Predicated region
      $region33: #{tpu_custom_call.1} parent=5 // pred_check
        %p2962 = pneg %p2961
      $region34: #{tpu_custom_call.1} parent=5 // pred_check_branch
        %2964 = sbr.rel (%p2962) target = $region36
      $region35: #{tpu_custom_call.1} parent=5 // pred_region
        %s2965 = ssub.s32 %s13, 2
        // Predicated region
        $region37: #{tpu_custom_call.1} parent=35 // pred_check
          %p2966 = pneg %p68
        $region38: #{tpu_custom_call.1} parent=35 // pred_check_branch
          %2968 = sbr.rel (%p2966) target = $region40
        $region39: #{tpu_custom_call.1} parent=35 // pred_region
          %s2969 = sand.u32 %s53, 1
          %s2970 = scalar_lea.sflag [#allocation4], %s2969
          %s2971 = sand.u32 %s53, 1
          %s2972 = smul.addr %s2971, 32
          %s2973 = scalar_lea.vmem [#allocation5], %s2972
          %2974 = dma.done %s2970, 512
        $region40: #{tpu_custom_call.1} parent=35 // pred_fallthru
          _
      $region36: #{tpu_custom_call.1} parent=5 // pred_fallthru
        _
    $region6: #{tpu_custom_call.1} parent=1 // loop_footer
      %s17 = sadd.s32 1, %s13
    $region7: #{tpu_custom_call.1} parent=1 // loop_footer_branch
      %12 = sbr.rel target = $region3
    $region8: #{tpu_custom_call.1} parent=1 // loop_exit
      _
    %2975 = vsyncpa [#allocation3], 1
    %s2976 = scalar_lea.sflag [#allocation3], 1
    %2977 = vsyncpa %s2976, 1
    %2978 = vsyncpa [#allocation4], 1
    %s2979 = scalar_lea.sflag [#allocation4], 1
    %2980 = vsyncpa %s2979, 1

</llo_original>
